<compile_context>
chip_gen: v7x
topology: tpu7x:2x2x1
jax: 0.10.0
libtpu: 0.0.40
codegen_flags: <defaults>
</compile_context>

<pallas_src>
import functools

import jax
import jax.numpy as jnp
from jax.experimental import pallas as pl
from jax.experimental.pallas import tpu as pltpu

LEAKY_SLOPE = 0.01   # F.leaky_relu default
BN_EPS = 1e-5        # nn.BatchNorm1d default
NORM_EPS = 1e-12     # F.normalize default
LANE = 128
NEG_BIG = -1e30      # bias for padded cluster columns -> softmax prob == 0


def _round_up(v, m):
    return (v + m - 1) // m * m


def _leaky_relu(x):
    # one vmul + vmax instead of compare + select
    return jnp.maximum(x, LEAKY_SLOPE * x)


def _tile_spec(bt, *trailing):
    """Block over the leading batch axis, full extent on trailing dims."""
    n_trail = len(trailing)
    return pl.BlockSpec((bt,) + tuple(trailing),
                        lambda i, _n=n_trail: (i,) + (0,) * _n)


def _full_spec(*shape):
    """Whole (small) array resident for every grid step."""
    n = len(shape)
    return pl.BlockSpec(tuple(shape), lambda i, _n=n: (0,) * _n)


def _vmem_limit_bytes():
    """~half of physical VMEM (64 MiB on v5e/v6e, 32 MiB on v7x), capped."""
    default = 32 * 1024 * 1024
    try:
        cap = getattr(pltpu.get_tpu_info(), "vmem_capacity_bytes", None)
        if cap:
            return int(min(max(cap // 2, default), 100 * 1024 * 1024))
    except Exception:
        pass
    return default


def _auto_batch_tile(B, N, vmem_limit):
    """Pick Bt so each tile carries >= ~512 matmul rows, bounded by VMEM."""
    bt = min(B, max(1, 512 // max(N, 1)))
    # keep the double-buffered bf16 (Bt,N,N) adjacency tile under ~1/4 of VMEM
    adj_bytes_per_graph = 2 * N * N * 2
    cap = max(1, (vmem_limit // 4) // adj_bytes_per_graph)
    bt = min(bt, cap)
    while B % bt:
        bt -= 1
    # v7x has 2 TensorCores: prefer >= 2 grid steps if tiles stay >= 256 rows
    if B // bt == 1 and B % 2 == 0 and (B // 2) * N >= 256:
        bt = B // 2
    return bt


# --------------------------------------------------------------------------
# In-kernel helpers
# --------------------------------------------------------------------------

def _bn_leaky(y, stats, gamma, beta, count):
    """BatchNorm1d (training-mode, biased variance) + leaky_relu; dropout(p=0)==id."""
    inv_n = 1.0 / count
    mean = stats[0:1, :] * inv_n                               # (1, Hp)
    var = jnp.maximum(stats[1:2, :] * inv_n - mean * mean, 0.0)
    scale = gamma * jax.lax.rsqrt(var + BN_EPS)                # (1, Hp)
    shift = beta - mean * scale
    z = y * scale[None] + shift[None]                          # [Bt,N,Hp]
    return _leaky_relu(z)


def _conv_and_stats(h_bf, aw, w_rel, w_root, b_rel):
    """GraphConv ('add' aggregation) + per-tile BN partial (sum, sumsq)."""
    bt, n, hp = h_bf.shape
    # weighted 'add' aggregation over source nodes: agg_i = sum_j A[i,j] h_j
    agg = jnp.einsum('bij,bjh->bih', aw, h_bf,
                     preferred_element_type=jnp.float32)
    # two MXU dots (no concat -> no extra (Bt*N, 2Hp) VMEM copy)
    y2d = (jnp.dot(agg.astype(jnp.bfloat16).reshape(bt * n, hp), w_rel,
                   preferred_element_type=jnp.float32)
           + jnp.dot(h_bf.reshape(bt * n, hp), w_root,
                     preferred_element_type=jnp.float32)
           + b_rel)
    # one traversal: per-tile partial sum / sum-of-squares (f32)
    ssum = jnp.sum(y2d, axis=0, keepdims=True)                 # (1, Hp)
    ssq = jnp.sum(y2d * y2d, axis=0, keepdims=True)            # (1, Hp)
    return y2d.reshape(bt, n, hp), jnp.concatenate([ssum, ssq], axis=0)


# --------------------------------------------------------------------------
# Kernels
# --------------------------------------------------------------------------

def _first_layer_kernel(x_ref, aw_ref, w_pre_ref, b_pre_ref,
                        w_rel_ref, w_root_ref, b_rel_ref,
                        y_ref, stats_ref):
    """pre_mp Linear fused with GraphConv layer 0 + BN partial stats."""
    bt, n, dp = x_ref.shape
    hp = w_pre_ref.shape[1]
    h2d = jnp.dot(x_ref[...].reshape(bt * n, dp), w_pre_ref[...],
                  preferred_element_type=jnp.float32) + b_pre_ref[...]
    h_bf = h2d.astype(jnp.bfloat16).reshape(bt, n, hp)
    y, stats = _conv_and_stats(h_bf, aw_ref[...], w_rel_ref[...],
                               w_root_ref[...], b_rel_ref[...])
    y_ref[...] = y
    stats_ref[...] = stats[None]                               # (1, 2, Hp)


def _mid_layer_kernel(y_prev_ref, part_ref, aw_ref, gamma_ref, beta_ref,
                      w_rel_ref, w_root_ref, b_rel_ref,
                      y_ref, stats_ref, *, count):
    """BN(prev layer) + leaky fused with GraphConv layer l + BN partial stats."""
    stats_prev = jnp.sum(part_ref[...], axis=0)                # (2, Hp) global
    h = _bn_leaky(y_prev_ref[...], stats_prev, gamma_ref[...], beta_ref[...],
                  count)
    y, stats = _conv_and_stats(h.astype(jnp.bfloat16), aw_ref[...],
                               w_rel_ref[...], w_root_ref[...], b_rel_ref[...])
    y_ref[...] = y
    stats_ref[...] = stats[None]


def _pool_kernel(y_prev_ref, part_ref, gamma_ref, beta_ref,
                 wp_ref, bp_ref, out_ref, *, count, n_clusters):
    """BN(last layer)+leaky -> pool Linear -> softmax -> s^T h -> leaky ->
    mean over clusters -> L2 normalize."""
    stats_prev = jnp.sum(part_ref[...], axis=0)
    h = _bn_leaky(y_prev_ref[...], stats_prev, gamma_ref[...], beta_ref[...],
                  count)
    bt, n, hp = h.shape
    cp = wp_ref.shape[1]
    h_bf = h.astype(jnp.bfloat16)

    logits = jnp.dot(h_bf.reshape(bt * n, hp), wp_ref[...],
                     preferred_element_type=jnp.float32) + bp_ref[...]
    # stable softmax in f32; padded cluster columns carry -1e30 bias -> prob 0
    m = jnp.max(logits, axis=-1, keepdims=True)
    e = jnp.exp(logits - m)
    s = e / jnp.sum(e, axis=-1, keepdims=True)
    s3 = s.reshape(bt, n, cp)

    # dense_mincut_pool output: pooled = s^T @ h (mask is all-True)
    pooled = jnp.einsum('bnc,bnh->bch', s3.astype(jnp.bfloat16), h_bf,
                        preferred_element_type=jnp.float32)    # [Bt, Cp, Hp]
    pooled = _leaky_relu(pooled)

    # mean over *real* clusters (padded clusters are exactly 0)
    g = jnp.sum(pooled, axis=1) * (1.0 / float(n_clusters))    # [Bt, Hp]
    sumsq = jnp.sum(g * g, axis=-1, keepdims=True)
    # F.normalize: x / max(||x||, eps) == x * rsqrt(max(||x||^2, eps^2))
    g = g * jax.lax.rsqrt(jnp.maximum(sumsq, NORM_EPS * NORM_EPS))
    out_ref[...] = g[None]                                     # (1, Bt, Hp)


# --------------------------------------------------------------------------
# Wrapper
# --------------------------------------------------------------------------

def gnn_graph_extractor(x, a_w, params, *, batch_tile=None):
    """x: [B, N, node_dim] f32; a_w: [B, N, N] f32 (A_w[b, tgt, src])."""
    B, N, D = x.shape
    L, H = params['bn_gamma'].shape
    C = params['w_pool'].shape[1]
    assert L >= 1, "need at least one GraphConv layer"
    assert N % 8 == 0, "node count must be a multiple of 8 (sublane)"

    vmem_limit = _vmem_limit_bytes()
    Bt = batch_tile if batch_tile is not None else _auto_batch_tile(B, N, vmem_limit)
    assert B % Bt == 0, "batch must be divisible by batch_tile"
    n_tiles = B // Bt

    Dp = _round_up(D, LANE)
    Hp = _round_up(H, LANE)
    Cp = _round_up(C, LANE)
    f32, bf16 = jnp.float32, jnp.bfloat16

    # --- pad parameters; zero padding keeps padded feature channels == 0 ----
    w_pre_p = jnp.zeros((Dp, Hp), f32).at[:D, :H].set(params['w_pre']).astype(bf16)
    b_pre_p = jnp.zeros((1, Hp), f32).at[0, :H].set(params['b_pre'])
    w_rel_p = jnp.zeros((L, Hp, Hp), f32).at[:, :H, :H].set(params['w_rel']).astype(bf16)
    w_root_p = jnp.zeros((L, Hp, Hp), f32).at[:, :H, :H].set(params['w_root']).astype(bf16)
    b_rel_p = jnp.zeros((L, 1, Hp), f32).at[:, 0, :H].set(params['b_rel'])
    gamma_p = jnp.zeros((L, 1, Hp), f32).at[:, 0, :H].set(params['bn_gamma'])
    beta_p = jnp.zeros((L, 1, Hp), f32).at[:, 0, :H].set(params['bn_beta'])
    w_pool_p = jnp.zeros((Hp, Cp), f32).at[:H, :C].set(params['w_pool']).astype(bf16)
    b_pool_p = jnp.full((1, Cp), NEG_BIG, f32).at[0, :C].set(params['b_pool'])

    # bf16 MXU operands for the big O(B*N^2) / O(B*N*D) inputs (f32 accumulate)
    x_p = jnp.zeros((B, N, Dp), f32).at[:, :, :D].set(x).astype(bf16)
    a_w_bf = a_w.astype(bf16)

    grid = (n_tiles,)
    cparams = pltpu.CompilerParams(
        dimension_semantics=("parallel",),          # megacore-shard the batch
        vmem_limit_bytes=vmem_limit,
    )
    count = float(B * N)

    y_out = (jax.ShapeDtypeStruct((B, N, Hp), f32),
             jax.ShapeDtypeStruct((n_tiles, 2, Hp), f32))
    y_specs = (_tile_spec(Bt, N, Hp),
               pl.BlockSpec((1, 2, Hp), lambda i: (i, 0, 0)))

    # --- layer 0: pre_mp + GraphConv + BN partials (fused) -------------------
    y, part = pl.pallas_call(
        _first_layer_kernel,
        grid=grid,
        in_specs=[_tile_spec(Bt, N, Dp), _tile_spec(Bt, N, N),
                  _full_spec(Dp, Hp), _full_spec(1, Hp),
                  _full_spec(Hp, Hp), _full_spec(Hp, Hp), _full_spec(1, Hp)],
        out_specs=y_specs,
        out_shape=y_out,
        compiler_params=cparams,
        cost_estimate=pl.CostEstimate(
            flops=int(2 * B * N * (Dp * Hp + N * Hp + 2 * Hp * Hp)),
            transcendentals=0,
            bytes_accessed=int(B * N * (Dp + N) * 2 + B * N * Hp * 4
                               + (Dp * Hp + 2 * Hp * Hp) * 2)),
    )(x_p, a_w_bf, w_pre_p, b_pre_p, w_rel_p[0], w_root_p[0], b_rel_p[0])

    # --- layers 1..L-1: BN(l-1)+leaky fused into GraphConv(l) ----------------
    for l in range(1, L):
        y, part = pl.pallas_call(
            functools.partial(_mid_layer_kernel, count=count),
            grid=grid,
            in_specs=[_tile_spec(Bt, N, Hp), _full_spec(n_tiles, 2, Hp),
                      _tile_spec(Bt, N, N),
                      _full_spec(1, Hp), _full_spec(1, Hp),
                      _full_spec(Hp, Hp), _full_spec(Hp, Hp), _full_spec(1, Hp)],
            out_specs=y_specs,
            out_shape=y_out,
            compiler_params=cparams,
            cost_estimate=pl.CostEstimate(
                flops=int(2 * B * N * (N * Hp + 2 * Hp * Hp) + 6 * B * N * Hp),
                transcendentals=0,
                bytes_accessed=int(B * N * N * 2 + 2 * B * N * Hp * 4
                                   + 2 * Hp * Hp * 2)),
        )(y, part, a_w_bf, gamma_p[l - 1], beta_p[l - 1],
          w_rel_p[l], w_root_p[l], b_rel_p[l])

    # --- final: BN(L-1)+leaky + pool + softmax + mincut out + mean + norm ----
    g = pl.pallas_call(
        functools.partial(_pool_kernel, count=count, n_clusters=C),
        grid=grid,
        in_specs=[_tile_spec(Bt, N, Hp), _full_spec(n_tiles, 2, Hp),
                  _full_spec(1, Hp), _full_spec(1, Hp),
                  _full_spec(Hp, Cp), _full_spec(1, Cp)],
        out_specs=pl.BlockSpec((1, Bt, Hp), lambda i: (i, 0, 0)),
        out_shape=jax.ShapeDtypeStruct((n_tiles, Bt, Hp), f32),
        compiler_params=cparams,
        cost_estimate=pl.CostEstimate(
            flops=int(4 * B * N * Hp * Cp + 10 * B * N * Hp),
            transcendentals=int(B * N * Cp),
            bytes_accessed=int(B * N * Hp * 4 + Hp * Cp * 2 + B * Hp * 4)),
    )(y, part, gamma_p[L - 1], beta_p[L - 1], w_pool_p, b_pool_p)

    # lane-dense (Hp=128) output slab from the kernel; slice back outside.
    return g.reshape(B, Hp)[:, :H]


# --------------------------------------------------------------------------
# Deterministic synthetic parameters (PyTorch-Linear-style uniform init)
# --------------------------------------------------------------------------

def init_params(key, node_dim, hidden, num_layers, n_clusters):
    def lin(k, fan_in, fan_out):
        bound = 1.0 / float(fan_in) ** 0.5
        kw, kb = jax.random.split(k)
        w = jax.random.uniform(kw, (fan_in, fan_out), jnp.float32, -bound, bound)
        b = jax.random.uniform(kb, (fan_out,), jnp.float32, -bound, bound)
        return w, b

    keys = jax.random.split(key, 3)
    w_pre, b_pre = lin(keys[0], node_dim, hidden)

    w_rel, b_rel, w_root = [], [], []
    layer_keys = jax.random.split(keys[1], 2 * num_layers)
    for l in range(num_layers):
        w1, b1 = lin(layer_keys[2 * l], hidden, hidden)      # lin_rel (bias)
        w2, _ = lin(layer_keys[2 * l + 1], hidden, hidden)   # lin_root (no bias)
        w_rel.append(w1); b_rel.append(b1); w_root.append(w2)

    w_pool, b_pool = lin(keys[2], hidden, n_clusters)

    return dict(
        w_pre=w_pre, b_pre=b_pre,
        w_rel=jnp.stack(w_rel),                        # [L, H, H]
        b_rel=jnp.stack(b_rel),                        # [L, H]
        w_root=jnp.stack(w_root),                      # [L, H, H]
        bn_gamma=jnp.ones((num_layers, hidden), jnp.float32),
        bn_beta=jnp.zeros((num_layers, hidden), jnp.float32),
        w_pool=w_pool, b_pool=b_pool,
    )


if __name__ == "__main__":
    # Small shapes consistent with the module: B graphs, each N nodes of dim
    # node_dim and E edges (equal lens per graph, all-True dense-batch mask).
    B, N, E = 2, 16, 24
    node_dim, hidden, num_layers, n_clusters = 8, 32, 2, 2

    key = jax.random.PRNGKey(0)
    k_x, k_ei, k_ea, k_p = jax.random.split(key, 4)

    x = jax.random.normal(k_x, (B, N, node_dim), jnp.float32)
    edge_index = jax.random.randint(k_ei, (B, 2, E), 0, N)          # [B, 2, E]
    edge_attr = jax.random.uniform(k_ea, (B, E), jnp.float32)       # [B, E]

    # TODO(synk): preprocess_graph_representation / to_dense_adj sparse->dense
    # scatter (and variable per-graph lens/masking) stay in plain JAX.
    b_idx = jnp.repeat(jnp.arange(B), E)
    src = edge_index[:, 0, :].reshape(-1)
    tgt = edge_index[:, 1, :].reshape(-1)
    a_w = jnp.zeros((B, N, N), jnp.float32).at[b_idx, tgt, src].add(
        edge_attr.reshape(-1))

    params = init_params(k_p, node_dim, hidden, num_layers, n_clusters)

    out = jax.jit(gnn_graph_extractor)(x, a_w, params)
    jax.block_until_ready(out)
    assert out.shape == (B, hidden) and out.dtype == jnp.float32
    print("KERNEL_OK")
</pallas_src>

<mosaic_0001>
module attributes {stable_mosaic.version = 11 : i64} {
  func.func @_first_layer_kernel(%arg0: i32, %arg1: memref<2x16x128xbf16, #tpu.memory_space<vmem>>, %arg2: memref<2x16x16xbf16, #tpu.memory_space<vmem>>, %arg3: memref<128x128xbf16, #tpu.memory_space<vmem>>, %arg4: memref<1x128xf32, #tpu.memory_space<vmem>>, %arg5: memref<128x128xbf16, #tpu.memory_space<vmem>>, %arg6: memref<128x128xbf16, #tpu.memory_space<vmem>>, %arg7: memref<1x128xf32, #tpu.memory_space<vmem>>, %arg8: memref<2x16x128xf32, #tpu.memory_space<vmem>>, %arg9: memref<1x2x128xf32, #tpu.memory_space<vmem>>) attributes {dimension_semantics = [#tpu.dimension_semantics<parallel>], iteration_bounds = array<i64: 1>, scalar_prefetch = 0 : i64, scratch_operands = 0 : i64, tpu.core_type = #tpu.core_type<tc>, window_params = [{transform_indices = @transform_0, window_bounds = array<i64: 2, 16, 128>}, {transform_indices = @transform_1, window_bounds = array<i64: 2, 16, 16>}, {pipeline_mode = #tpu.pipeline_mode<synchronous>, transform_indices = @transform_2, window_bounds = array<i64: 128, 128>}, {pipeline_mode = #tpu.pipeline_mode<synchronous>, transform_indices = @transform_3, window_bounds = array<i64: 1, 128>}, {pipeline_mode = #tpu.pipeline_mode<synchronous>, transform_indices = @transform_4, window_bounds = array<i64: 128, 128>}, {pipeline_mode = #tpu.pipeline_mode<synchronous>, transform_indices = @transform_5, window_bounds = array<i64: 128, 128>}, {pipeline_mode = #tpu.pipeline_mode<synchronous>, transform_indices = @transform_6, window_bounds = array<i64: 1, 128>}, {transform_indices = @transform_7, window_bounds = array<i64: 2, 16, 128>}, {transform_indices = @transform_8, window_bounds = array<i64: 1, 2, 128>}]} {
    %c0 = arith.constant 0 : index
    %c0_0 = arith.constant 0 : index
    %c0_1 = arith.constant 0 : index
    %0 = vector.load %arg1[%c0, %c0_0, %c0_1] : memref<2x16x128xbf16, #tpu.memory_space<vmem>>, vector<2x16x128xbf16>
    %1 = vector.shape_cast %0 : vector<2x16x128xbf16> to vector<32x128xbf16>
    %c0_2 = arith.constant 0 : index
    %c0_3 = arith.constant 0 : index
    %2 = vector.load %arg3[%c0_2, %c0_3] : memref<128x128xbf16, #tpu.memory_space<vmem>>, vector<128x128xbf16>
    %cst = arith.constant dense<0.000000e+00> : vector<32x128xf32>
    %3 = tpu.matmul %1, %2, %cst {dimension_numbers = #tpu.dot_dimension_numbers<[1], [0], [0], [1], [0, 0, 1, 1], [], []>} : vector<32x128xbf16>, vector<128x128xbf16>, vector<32x128xf32> -> vector<32x128xf32>
    %c0_4 = arith.constant 0 : index
    %c0_5 = arith.constant 0 : index
    %4 = vector.load %arg4[%c0_4, %c0_5] : memref<1x128xf32, #tpu.memory_space<vmem>>, vector<1x128xf32>
    %5 = vector.broadcast %4 : vector<1x128xf32> to vector<32x128xf32>
    %6 = arith.addf %3, %5 : vector<32x128xf32>
    %7 = arith.truncf %6 : vector<32x128xf32> to vector<32x128xbf16>
    %8 = vector.shape_cast %7 : vector<32x128xbf16> to vector<2x16x128xbf16>
    %c0_6 = arith.constant 0 : index
    %c0_7 = arith.constant 0 : index
    %c0_8 = arith.constant 0 : index
    %9 = vector.load %arg2[%c0_6, %c0_7, %c0_8] : memref<2x16x16xbf16, #tpu.memory_space<vmem>>, vector<2x16x16xbf16>
    %c0_9 = arith.constant 0 : index
    %c0_10 = arith.constant 0 : index
    %10 = vector.load %arg5[%c0_9, %c0_10] : memref<128x128xbf16, #tpu.memory_space<vmem>>, vector<128x128xbf16>
    %c0_11 = arith.constant 0 : index
    %c0_12 = arith.constant 0 : index
    %11 = vector.load %arg6[%c0_11, %c0_12] : memref<128x128xbf16, #tpu.memory_space<vmem>>, vector<128x128xbf16>
    %c0_13 = arith.constant 0 : index
    %c0_14 = arith.constant 0 : index
    %12 = vector.load %arg7[%c0_13, %c0_14] : memref<1x128xf32, #tpu.memory_space<vmem>>, vector<1x128xf32>
    "tpu.trace_start"() <{level = 10 : i32, message = "bij,bjh->bih"}> : () -> ()
    %cst_15 = arith.constant dense<0.000000e+00> : vector<2x16x128xf32>
    %13 = tpu.matmul %9, %8, %cst_15 {dimension_numbers = #tpu.dot_dimension_numbers<[2], [1], [1], [2], [0, 0, 0, 1, 1, 2], [0], [0]>} : vector<2x16x16xbf16>, vector<2x16x128xbf16>, vector<2x16x128xf32> -> vector<2x16x128xf32>
    "tpu.trace_stop"() : () -> ()
    %14 = arith.truncf %13 : vector<2x16x128xf32> to vector<2x16x128xbf16>
    %15 = vector.shape_cast %14 : vector<2x16x128xbf16> to vector<32x128xbf16>
    %cst_16 = arith.constant dense<0.000000e+00> : vector<32x128xf32>
    %16 = tpu.matmul %15, %10, %cst_16 {dimension_numbers = #tpu.dot_dimension_numbers<[1], [0], [0], [1], [0, 0, 1, 1], [], []>} : vector<32x128xbf16>, vector<128x128xbf16>, vector<32x128xf32> -> vector<32x128xf32>
    %17 = vector.shape_cast %8 : vector<2x16x128xbf16> to vector<32x128xbf16>
    %cst_17 = arith.constant dense<0.000000e+00> : vector<32x128xf32>
    %18 = tpu.matmul %17, %11, %cst_17 {dimension_numbers = #tpu.dot_dimension_numbers<[1], [0], [0], [1], [0, 0, 1, 1], [], []>} : vector<32x128xbf16>, vector<128x128xbf16>, vector<32x128xf32> -> vector<32x128xf32>
    %19 = arith.addf %16, %18 : vector<32x128xf32>
    %20 = vector.broadcast %12 : vector<1x128xf32> to vector<32x128xf32>
    %21 = arith.addf %19, %20 : vector<32x128xf32>
    %cst_18 = arith.constant dense<0.000000e+00> : vector<128xf32>
    %22 = vector.multi_reduction <add>, %21, %cst_18 [0] : vector<32x128xf32> to vector<128xf32>
    %23 = vector.shape_cast %22 : vector<128xf32> to vector<1x128xf32>
    %24 = arith.mulf %21, %21 : vector<32x128xf32>
    %cst_19 = arith.constant dense<0.000000e+00> : vector<128xf32>
    %25 = vector.multi_reduction <add>, %24, %cst_19 [0] : vector<32x128xf32> to vector<128xf32>
    %26 = vector.shape_cast %25 : vector<128xf32> to vector<1x128xf32>
    %27 = vector.shape_cast %21 : vector<32x128xf32> to vector<2x16x128xf32>
    %28 = tpu.concatenate %23, %26 in 0 : vector<1x128xf32>, vector<1x128xf32> -> vector<2x128xf32>
    %c0_20 = arith.constant 0 : index
    %c0_21 = arith.constant 0 : index
    %c0_22 = arith.constant 0 : index
    %29 = vector.load %arg8[%c0_20, %c0_21, %c0_22] : memref<2x16x128xf32, #tpu.memory_space<vmem>>, vector<2x16x128xf32>
    tpu.vector_store %arg8[%c0_20, %c0_21, %c0_22], %27 {strides = array<i32>} : memref<2x16x128xf32, #tpu.memory_space<vmem>>, vector<2x16x128xf32>,
    %30 = vector.shape_cast %28 : vector<2x128xf32> to vector<1x2x128xf32>
    %c0_23 = arith.constant 0 : index
    %c0_24 = arith.constant 0 : index
    %c0_25 = arith.constant 0 : index
    %31 = vector.load %arg9[%c0_23, %c0_24, %c0_25] : memref<1x2x128xf32, #tpu.memory_space<vmem>>, vector<1x2x128xf32>
    tpu.vector_store %arg9[%c0_23, %c0_24, %c0_25], %30 {strides = array<i32>} : memref<1x2x128xf32, #tpu.memory_space<vmem>>, vector<1x2x128xf32>,
    return
  }
  func.func @transform_0(%arg0: i32) -> (i32, i32, i32) {
    %c0_i32 = arith.constant 0 : i32
    %c0_i32_0 = arith.constant 0 : i32
    %c0_i32_1 = arith.constant 0 : i32
    return %arg0, %c0_i32, %c0_i32_0 : i32, i32, i32
  }
  func.func @transform_1(%arg0: i32) -> (i32, i32, i32) {
    %c0_i32 = arith.constant 0 : i32
    %c0_i32_0 = arith.constant 0 : i32
    %c0_i32_1 = arith.constant 0 : i32
    return %arg0, %c0_i32, %c0_i32_0 : i32, i32, i32
  }
  func.func @transform_2(%arg0: i32) -> (i32, i32) {
    %c0_i32 = arith.constant 0 : i32
    %c0_i32_0 = arith.constant 0 : i32
    %c0_i32_1 = arith.constant 0 : i32
    return %c0_i32, %c0_i32_0 : i32, i32
  }
  func.func @transform_3(%arg0: i32) -> (i32, i32) {
    %c0_i32 = arith.constant 0 : i32
    %c0_i32_0 = arith.constant 0 : i32
    %c0_i32_1 = arith.constant 0 : i32
    return %c0_i32, %c0_i32_0 : i32, i32
  }
  func.func @transform_4(%arg0: i32) -> (i32, i32) {
    %c0_i32 = arith.constant 0 : i32
    %c0_i32_0 = arith.constant 0 : i32
    %c0_i32_1 = arith.constant 0 : i32
    return %c0_i32, %c0_i32_0 : i32, i32
  }
  func.func @transform_5(%arg0: i32) -> (i32, i32) {
    %c0_i32 = arith.constant 0 : i32
    %c0_i32_0 = arith.constant 0 : i32
    %c0_i32_1 = arith.constant 0 : i32
    return %c0_i32, %c0_i32_0 : i32, i32
  }
  func.func @transform_6(%arg0: i32) -> (i32, i32) {
    %c0_i32 = arith.constant 0 : i32
    %c0_i32_0 = arith.constant 0 : i32
    %c0_i32_1 = arith.constant 0 : i32
    return %c0_i32, %c0_i32_0 : i32, i32
  }
  func.func @transform_7(%arg0: i32) -> (i32, i32, i32) {
    %c0_i32 = arith.constant 0 : i32
    %c0_i32_0 = arith.constant 0 : i32
    %c0_i32_1 = arith.constant 0 : i32
    return %arg0, %c0_i32, %c0_i32_0 : i32, i32, i32
  }
  func.func @transform_8(%arg0: i32) -> (i32, i32, i32) {
    %c0_i32 = arith.constant 0 : i32
    %c0_i32_0 = arith.constant 0 : i32
    %c0_i32_1 = arith.constant 0 : i32
    return %arg0, %c0_i32, %c0_i32_0 : i32, i32, i32
  }
}

module attributes {stable_mosaic.version = 11 : i64} {
  func.func @_mid_layer_kernel(%arg0: i32, %arg1: memref<2x16x128xf32, #tpu.memory_space<vmem>>, %arg2: memref<1x2x128xf32, #tpu.memory_space<vmem>>, %arg3: memref<2x16x16xbf16, #tpu.memory_space<vmem>>, %arg4: memref<1x128xf32, #tpu.memory_space<vmem>>, %arg5: memref<1x128xf32, #tpu.memory_space<vmem>>, %arg6: memref<128x128xbf16, #tpu.memory_space<vmem>>, %arg7: memref<128x128xbf16, #tpu.memory_space<vmem>>, %arg8: memref<1x128xf32, #tpu.memory_space<vmem>>, %arg9: memref<2x16x128xf32, #tpu.memory_space<vmem>>, %arg10: memref<1x2x128xf32, #tpu.memory_space<vmem>>) attributes {dimension_semantics = [#tpu.dimension_semantics<parallel>], iteration_bounds = array<i64: 1>, scalar_prefetch = 0 : i64, scratch_operands = 0 : i64, tpu.core_type = #tpu.core_type<tc>, window_params = [{transform_indices = @transform_0, window_bounds = array<i64: 2, 16, 128>}, {pipeline_mode = #tpu.pipeline_mode<synchronous>, transform_indices = @transform_1, window_bounds = array<i64: 1, 2, 128>}, {transform_indices = @transform_2, window_bounds = array<i64: 2, 16, 16>}, {pipeline_mode = #tpu.pipeline_mode<synchronous>, transform_indices = @transform_3, window_bounds = array<i64: 1, 128>}, {pipeline_mode = #tpu.pipeline_mode<synchronous>, transform_indices = @transform_4, window_bounds = array<i64: 1, 128>}, {pipeline_mode = #tpu.pipeline_mode<synchronous>, transform_indices = @transform_5, window_bounds = array<i64: 128, 128>}, {pipeline_mode = #tpu.pipeline_mode<synchronous>, transform_indices = @transform_6, window_bounds = array<i64: 128, 128>}, {pipeline_mode = #tpu.pipeline_mode<synchronous>, transform_indices = @transform_7, window_bounds = array<i64: 1, 128>}, {transform_indices = @transform_8, window_bounds = array<i64: 2, 16, 128>}, {transform_indices = @transform_9, window_bounds = array<i64: 1, 2, 128>}]} {
    %c0 = arith.constant 0 : index
    %c0_0 = arith.constant 0 : index
    %c0_1 = arith.constant 0 : index
    %0 = vector.load %arg2[%c0, %c0_0, %c0_1] : memref<1x2x128xf32, #tpu.memory_space<vmem>>, vector<1x2x128xf32>
    %cst = arith.constant dense<0.000000e+00> : vector<2x128xf32>
    %1 = vector.multi_reduction <add>, %0, %cst [0] : vector<1x2x128xf32> to vector<2x128xf32>
    %c0_2 = arith.constant 0 : index
    %c0_3 = arith.constant 0 : index
    %c0_4 = arith.constant 0 : index
    %2 = vector.load %arg1[%c0_2, %c0_3, %c0_4] : memref<2x16x128xf32, #tpu.memory_space<vmem>>, vector<2x16x128xf32>
    %c0_5 = arith.constant 0 : index
    %c0_6 = arith.constant 0 : index
    %3 = vector.load %arg4[%c0_5, %c0_6] : memref<1x128xf32, #tpu.memory_space<vmem>>, vector<1x128xf32>
    %c0_7 = arith.constant 0 : index
    %c0_8 = arith.constant 0 : index
    %4 = vector.load %arg5[%c0_7, %c0_8] : memref<1x128xf32, #tpu.memory_space<vmem>>, vector<1x128xf32>
    %5 = vector.extract_strided_slice %1 {offsets = [0, 0], sizes = [1, 128], strides = [1, 1]} : vector<2x128xf32> to vector<1x128xf32>
    %cst_9 = arith.constant 3.125000e-02 : f32
    %6 = vector.broadcast %cst_9 : f32 to vector<1x128xf32>
    %7 = arith.mulf %5, %6 : vector<1x128xf32>
    %8 = vector.extract_strided_slice %1 {offsets = [1, 0], sizes = [1, 128], strides = [1, 1]} : vector<2x128xf32> to vector<1x128xf32>
    %cst_10 = arith.constant 3.125000e-02 : f32
    %9 = vector.broadcast %cst_10 : f32 to vector<1x128xf32>
    %10 = arith.mulf %8, %9 : vector<1x128xf32>
    %11 = arith.mulf %7, %7 : vector<1x128xf32>
    %12 = arith.subf %10, %11 : vector<1x128xf32>
    %cst_11 = arith.constant 0.000000e+00 : f32
    %13 = vector.broadcast %cst_11 : f32 to vector<1x128xf32>
    %14 = arith.maximumf %12, %13 : vector<1x128xf32>
    %cst_12 = arith.constant 9.99999974E-6 : f32
    %15 = vector.broadcast %cst_12 : f32 to vector<1x128xf32>
    %16 = arith.addf %14, %15 : vector<1x128xf32>
    %17 = math.rsqrt %16 : vector<1x128xf32>
    %18 = arith.mulf %3, %17 : vector<1x128xf32>
    %19 = arith.mulf %7, %18 : vector<1x128xf32>
    %20 = arith.subf %4, %19 : vector<1x128xf32>
    %21 = vector.shape_cast %18 : vector<1x128xf32> to vector<1x1x128xf32>
    %22 = vector.broadcast %21 : vector<1x1x128xf32> to vector<2x16x128xf32>
    %23 = arith.mulf %2, %22 : vector<2x16x128xf32>
    %24 = vector.shape_cast %20 : vector<1x128xf32> to vector<1x1x128xf32>
    %25 = vector.broadcast %24 : vector<1x1x128xf32> to vector<2x16x128xf32>
    %26 = arith.addf %23, %25 : vector<2x16x128xf32>
    %cst_13 = arith.constant 0.00999999977 : f32
    %27 = vector.broadcast %cst_13 : f32 to vector<2x16x128xf32>
    %28 = arith.mulf %27, %26 : vector<2x16x128xf32>
    %29 = arith.maximumf %26, %28 : vector<2x16x128xf32>
    %30 = arith.truncf %29 : vector<2x16x128xf32> to vector<2x16x128xbf16>
    %c0_14 = arith.constant 0 : index
    %c0_15 = arith.constant 0 : index
    %c0_16 = arith.constant 0 : index
    %31 = vector.load %arg3[%c0_14, %c0_15, %c0_16] : memref<2x16x16xbf16, #tpu.memory_space<vmem>>, vector<2x16x16xbf16>
    %c0_17 = arith.constant 0 : index
    %c0_18 = arith.constant 0 : index
    %32 = vector.load %arg6[%c0_17, %c0_18] : memref<128x128xbf16, #tpu.memory_space<vmem>>, vector<128x128xbf16>
    %c0_19 = arith.constant 0 : index
    %c0_20 = arith.constant 0 : index
    %33 = vector.load %arg7[%c0_19, %c0_20] : memref<128x128xbf16, #tpu.memory_space<vmem>>, vector<128x128xbf16>
    %c0_21 = arith.constant 0 : index
    %c0_22 = arith.constant 0 : index
    %34 = vector.load %arg8[%c0_21, %c0_22] : memref<1x128xf32, #tpu.memory_space<vmem>>, vector<1x128xf32>
    "tpu.trace_start"() <{level = 10 : i32, message = "bij,bjh->bih"}> : () -> ()
    %cst_23 = arith.constant dense<0.000000e+00> : vector<2x16x128xf32>
    %35 = tpu.matmul %31, %30, %cst_23 {dimension_numbers = #tpu.dot_dimension_numbers<[2], [1], [1], [2], [0, 0, 0, 1, 1, 2], [0], [0]>} : vector<2x16x16xbf16>, vector<2x16x128xbf16>, vector<2x16x128xf32> -> vector<2x16x128xf32>
    "tpu.trace_stop"() : () -> ()
    %36 = arith.truncf %35 : vector<2x16x128xf32> to vector<2x16x128xbf16>
    %37 = vector.shape_cast %36 : vector<2x16x128xbf16> to vector<32x128xbf16>
    %cst_24 = arith.constant dense<0.000000e+00> : vector<32x128xf32>
    %38 = tpu.matmul %37, %32, %cst_24 {dimension_numbers = #tpu.dot_dimension_numbers<[1], [0], [0], [1], [0, 0, 1, 1], [], []>} : vector<32x128xbf16>, vector<128x128xbf16>, vector<32x128xf32> -> vector<32x128xf32>
    %39 = vector.shape_cast %30 : vector<2x16x128xbf16> to vector<32x128xbf16>
    %cst_25 = arith.constant dense<0.000000e+00> : vector<32x128xf32>
    %40 = tpu.matmul %39, %33, %cst_25 {dimension_numbers = #tpu.dot_dimension_numbers<[1], [0], [0], [1], [0, 0, 1, 1], [], []>} : vector<32x128xbf16>, vector<128x128xbf16>, vector<32x128xf32> -> vector<32x128xf32>
    %41 = arith.addf %38, %40 : vector<32x128xf32>
    %42 = vector.broadcast %34 : vector<1x128xf32> to vector<32x128xf32>
    %43 = arith.addf %41, %42 : vector<32x128xf32>
    %cst_26 = arith.constant dense<0.000000e+00> : vector<128xf32>
    %44 = vector.multi_reduction <add>, %43, %cst_26 [0] : vector<32x128xf32> to vector<128xf32>
    %45 = vector.shape_cast %44 : vector<128xf32> to vector<1x128xf32>
    %46 = arith.mulf %43, %43 : vector<32x128xf32>
    %cst_27 = arith.constant dense<0.000000e+00> : vector<128xf32>
    %47 = vector.multi_reduction <add>, %46, %cst_27 [0] : vector<32x128xf32> to vector<128xf32>
    %48 = vector.shape_cast %47 : vector<128xf32> to vector<1x128xf32>
    %49 = vector.shape_cast %43 : vector<32x128xf32> to vector<2x16x128xf32>
    %50 = tpu.concatenate %45, %48 in 0 : vector<1x128xf32>, vector<1x128xf32> -> vector<2x128xf32>
    %c0_28 = arith.constant 0 : index
    %c0_29 = arith.constant 0 : index
    %c0_30 = arith.constant 0 : index
    %51 = vector.load %arg9[%c0_28, %c0_29, %c0_30] : memref<2x16x128xf32, #tpu.memory_space<vmem>>, vector<2x16x128xf32>
    tpu.vector_store %arg9[%c0_28, %c0_29, %c0_30], %49 {strides = array<i32>} : memref<2x16x128xf32, #tpu.memory_space<vmem>>, vector<2x16x128xf32>,
    %52 = vector.shape_cast %50 : vector<2x128xf32> to vector<1x2x128xf32>
    %c0_31 = arith.constant 0 : index
    %c0_32 = arith.constant 0 : index
    %c0_33 = arith.constant 0 : index
    %53 = vector.load %arg10[%c0_31, %c0_32, %c0_33] : memref<1x2x128xf32, #tpu.memory_space<vmem>>, vector<1x2x128xf32>
    tpu.vector_store %arg10[%c0_31, %c0_32, %c0_33], %52 {strides = array<i32>} : memref<1x2x128xf32, #tpu.memory_space<vmem>>, vector<1x2x128xf32>,
    return
  }
  func.func @transform_0(%arg0: i32) -> (i32, i32, i32) {
    %c0_i32 = arith.constant 0 : i32
    %c0_i32_0 = arith.constant 0 : i32
    %c0_i32_1 = arith.constant 0 : i32
    return %arg0, %c0_i32, %c0_i32_0 : i32, i32, i32
  }
  func.func @transform_1(%arg0: i32) -> (i32, i32, i32) {
    %c0_i32 = arith.constant 0 : i32
    %c0_i32_0 = arith.constant 0 : i32
    %c0_i32_1 = arith.constant 0 : i32
    %c0_i32_2 = arith.constant 0 : i32
    return %c0_i32, %c0_i32_0, %c0_i32_1 : i32, i32, i32
  }
  func.func @transform_2(%arg0: i32) -> (i32, i32, i32) {
    %c0_i32 = arith.constant 0 : i32
    %c0_i32_0 = arith.constant 0 : i32
    %c0_i32_1 = arith.constant 0 : i32
    return %arg0, %c0_i32, %c0_i32_0 : i32, i32, i32
  }
  func.func @transform_3(%arg0: i32) -> (i32, i32) {
    %c0_i32 = arith.constant 0 : i32
    %c0_i32_0 = arith.constant 0 : i32
    %c0_i32_1 = arith.constant 0 : i32
    return %c0_i32, %c0_i32_0 : i32, i32
  }
  func.func @transform_4(%arg0: i32) -> (i32, i32) {
    %c0_i32 = arith.constant 0 : i32
    %c0_i32_0 = arith.constant 0 : i32
    %c0_i32_1 = arith.constant 0 : i32
    return %c0_i32, %c0_i32_0 : i32, i32
  }
  func.func @transform_5(%arg0: i32) -> (i32, i32) {
    %c0_i32 = arith.constant 0 : i32
    %c0_i32_0 = arith.constant 0 : i32
    %c0_i32_1 = arith.constant 0 : i32
    return %c0_i32, %c0_i32_0 : i32, i32
  }
  func.func @transform_6(%arg0: i32) -> (i32, i32) {
    %c0_i32 = arith.constant 0 : i32
    %c0_i32_0 = arith.constant 0 : i32
    %c0_i32_1 = arith.constant 0 : i32
    return %c0_i32, %c0_i32_0 : i32, i32
  }
  func.func @transform_7(%arg0: i32) -> (i32, i32) {
    %c0_i32 = arith.constant 0 : i32
    %c0_i32_0 = arith.constant 0 : i32
    %c0_i32_1 = arith.constant 0 : i32
    return %c0_i32, %c0_i32_0 : i32, i32
  }
  func.func @transform_8(%arg0: i32) -> (i32, i32, i32) {
    %c0_i32 = arith.constant 0 : i32
    %c0_i32_0 = arith.constant 0 : i32
    %c0_i32_1 = arith.constant 0 : i32
    return %arg0, %c0_i32, %c0_i32_0 : i32, i32, i32
  }
  func.func @transform_9(%arg0: i32) -> (i32, i32, i32) {
    %c0_i32 = arith.constant 0 : i32
    %c0_i32_0 = arith.constant 0 : i32
    %c0_i32_1 = arith.constant 0 : i32
    return %arg0, %c0_i32, %c0_i32_0 : i32, i32, i32
  }
}

module attributes {stable_mosaic.version = 11 : i64} {
  func.func @_pool_kernel(%arg0: i32, %arg1: memref<2x16x128xf32, #tpu.memory_space<vmem>>, %arg2: memref<1x2x128xf32, #tpu.memory_space<vmem>>, %arg3: memref<1x128xf32, #tpu.memory_space<vmem>>, %arg4: memref<1x128xf32, #tpu.memory_space<vmem>>, %arg5: memref<128x128xbf16, #tpu.memory_space<vmem>>, %arg6: memref<1x128xf32, #tpu.memory_space<vmem>>, %arg7: memref<1x2x128xf32, #tpu.memory_space<vmem>>) attributes {dimension_semantics = [#tpu.dimension_semantics<parallel>], iteration_bounds = array<i64: 1>, scalar_prefetch = 0 : i64, scratch_operands = 0 : i64, tpu.core_type = #tpu.core_type<tc>, window_params = [{transform_indices = @transform_0, window_bounds = array<i64: 2, 16, 128>}, {pipeline_mode = #tpu.pipeline_mode<synchronous>, transform_indices = @transform_1, window_bounds = array<i64: 1, 2, 128>}, {pipeline_mode = #tpu.pipeline_mode<synchronous>, transform_indices = @transform_2, window_bounds = array<i64: 1, 128>}, {pipeline_mode = #tpu.pipeline_mode<synchronous>, transform_indices = @transform_3, window_bounds = array<i64: 1, 128>}, {pipeline_mode = #tpu.pipeline_mode<synchronous>, transform_indices = @transform_4, window_bounds = array<i64: 128, 128>}, {pipeline_mode = #tpu.pipeline_mode<synchronous>, transform_indices = @transform_5, window_bounds = array<i64: 1, 128>}, {transform_indices = @transform_6, window_bounds = array<i64: 1, 2, 128>}]} {
    %c0 = arith.constant 0 : index
    %c0_0 = arith.constant 0 : index
    %c0_1 = arith.constant 0 : index
    %0 = vector.load %arg2[%c0, %c0_0, %c0_1] : memref<1x2x128xf32, #tpu.memory_space<vmem>>, vector<1x2x128xf32>
    %cst = arith.constant dense<0.000000e+00> : vector<2x128xf32>
    %1 = vector.multi_reduction <add>, %0, %cst [0] : vector<1x2x128xf32> to vector<2x128xf32>
    %c0_2 = arith.constant 0 : index
    %c0_3 = arith.constant 0 : index
    %c0_4 = arith.constant 0 : index
    %2 = vector.load %arg1[%c0_2, %c0_3, %c0_4] : memref<2x16x128xf32, #tpu.memory_space<vmem>>, vector<2x16x128xf32>
    %c0_5 = arith.constant 0 : index
    %c0_6 = arith.constant 0 : index
    %3 = vector.load %arg3[%c0_5, %c0_6] : memref<1x128xf32, #tpu.memory_space<vmem>>, vector<1x128xf32>
    %c0_7 = arith.constant 0 : index
    %c0_8 = arith.constant 0 : index
    %4 = vector.load %arg4[%c0_7, %c0_8] : memref<1x128xf32, #tpu.memory_space<vmem>>, vector<1x128xf32>
    %5 = vector.extract_strided_slice %1 {offsets = [0, 0], sizes = [1, 128], strides = [1, 1]} : vector<2x128xf32> to vector<1x128xf32>
    %cst_9 = arith.constant 3.125000e-02 : f32
    %6 = vector.broadcast %cst_9 : f32 to vector<1x128xf32>
    %7 = arith.mulf %5, %6 : vector<1x128xf32>
    %8 = vector.extract_strided_slice %1 {offsets = [1, 0], sizes = [1, 128], strides = [1, 1]} : vector<2x128xf32> to vector<1x128xf32>
    %cst_10 = arith.constant 3.125000e-02 : f32
    %9 = vector.broadcast %cst_10 : f32 to vector<1x128xf32>
    %10 = arith.mulf %8, %9 : vector<1x128xf32>
    %11 = arith.mulf %7, %7 : vector<1x128xf32>
    %12 = arith.subf %10, %11 : vector<1x128xf32>
    %cst_11 = arith.constant 0.000000e+00 : f32
    %13 = vector.broadcast %cst_11 : f32 to vector<1x128xf32>
    %14 = arith.maximumf %12, %13 : vector<1x128xf32>
    %cst_12 = arith.constant 9.99999974E-6 : f32
    %15 = vector.broadcast %cst_12 : f32 to vector<1x128xf32>
    %16 = arith.addf %14, %15 : vector<1x128xf32>
    %17 = math.rsqrt %16 : vector<1x128xf32>
    %18 = arith.mulf %3, %17 : vector<1x128xf32>
    %19 = arith.mulf %7, %18 : vector<1x128xf32>
    %20 = arith.subf %4, %19 : vector<1x128xf32>
    %21 = vector.shape_cast %18 : vector<1x128xf32> to vector<1x1x128xf32>
    %22 = vector.broadcast %21 : vector<1x1x128xf32> to vector<2x16x128xf32>
    %23 = arith.mulf %2, %22 : vector<2x16x128xf32>
    %24 = vector.shape_cast %20 : vector<1x128xf32> to vector<1x1x128xf32>
    %25 = vector.broadcast %24 : vector<1x1x128xf32> to vector<2x16x128xf32>
    %26 = arith.addf %23, %25 : vector<2x16x128xf32>
    %cst_13 = arith.constant 0.00999999977 : f32
    %27 = vector.broadcast %cst_13 : f32 to vector<2x16x128xf32>
    %28 = arith.mulf %27, %26 : vector<2x16x128xf32>
    %29 = arith.maximumf %26, %28 : vector<2x16x128xf32>
    %30 = arith.truncf %29 : vector<2x16x128xf32> to vector<2x16x128xbf16>
    %31 = vector.shape_cast %30 : vector<2x16x128xbf16> to vector<32x128xbf16>
    %c0_14 = arith.constant 0 : index
    %c0_15 = arith.constant 0 : index
    %32 = vector.load %arg5[%c0_14, %c0_15] : memref<128x128xbf16, #tpu.memory_space<vmem>>, vector<128x128xbf16>
    %cst_16 = arith.constant dense<0.000000e+00> : vector<32x128xf32>
    %33 = tpu.matmul %31, %32, %cst_16 {dimension_numbers = #tpu.dot_dimension_numbers<[1], [0], [0], [1], [0, 0, 1, 1], [], []>} : vector<32x128xbf16>, vector<128x128xbf16>, vector<32x128xf32> -> vector<32x128xf32>
    %c0_17 = arith.constant 0 : index
    %c0_18 = arith.constant 0 : index
    %34 = vector.load %arg6[%c0_17, %c0_18] : memref<1x128xf32, #tpu.memory_space<vmem>>, vector<1x128xf32>
    %35 = vector.broadcast %34 : vector<1x128xf32> to vector<32x128xf32>
    %36 = arith.addf %33, %35 : vector<32x128xf32>
    %cst_19 = arith.constant dense<0xFF800000> : vector<32xf32>
    %37 = vector.multi_reduction <maximumf>, %36, %cst_19 [1] : vector<32x128xf32> to vector<32xf32>
    %38 = vector.shape_cast %37 : vector<32xf32> to vector<32x1xf32>
    %39 = vector.broadcast %38 : vector<32x1xf32> to vector<32x128xf32>
    %40 = arith.subf %36, %39 : vector<32x128xf32>
    %41 = math.exp %40 : vector<32x128xf32>
    %cst_20 = arith.constant dense<0.000000e+00> : vector<32xf32>
    %42 = vector.multi_reduction <add>, %41, %cst_20 [1] : vector<32x128xf32> to vector<32xf32>
    %43 = vector.shape_cast %42 : vector<32xf32> to vector<32x1xf32>
    %44 = vector.broadcast %43 : vector<32x1xf32> to vector<32x128xf32>
    %45 = arith.divf %41, %44 : vector<32x128xf32>
    %46 = vector.shape_cast %45 : vector<32x128xf32> to vector<2x16x128xf32>
    %47 = arith.truncf %46 : vector<2x16x128xf32> to vector<2x16x128xbf16>
    "tpu.trace_start"() <{level = 10 : i32, message = "bnc,bnh->bch"}> : () -> ()
    %cst_21 = arith.constant dense<0.000000e+00> : vector<2x128x128xf32>
    %48 = tpu.matmul %47, %30, %cst_21 {dimension_numbers = #tpu.dot_dimension_numbers<[1], [1], [2], [2], [0, 0, 0, 2, 1, 2], [0], [0]>} : vector<2x16x128xbf16>, vector<2x16x128xbf16>, vector<2x128x128xf32> -> vector<2x128x128xf32>
    "tpu.trace_stop"() : () -> ()
    %cst_22 = arith.constant 0.00999999977 : f32
    %49 = vector.broadcast %cst_22 : f32 to vector<2x128x128xf32>
    %50 = arith.mulf %49, %48 : vector<2x128x128xf32>
    %51 = arith.maximumf %48, %50 : vector<2x128x128xf32>
    %cst_23 = arith.constant dense<0.000000e+00> : vector<2x128xf32>
    %52 = vector.multi_reduction <add>, %51, %cst_23 [1] : vector<2x128x128xf32> to vector<2x128xf32>
    %cst_24 = arith.constant 5.000000e-01 : f32
    %53 = vector.broadcast %cst_24 : f32 to vector<2x128xf32>
    %54 = arith.mulf %52, %53 : vector<2x128xf32>
    %55 = arith.mulf %54, %54 : vector<2x128xf32>
    %cst_25 = arith.constant dense<0.000000e+00> : vector<2xf32>
    %56 = vector.multi_reduction <add>, %55, %cst_25 [1] : vector<2x128xf32> to vector<2xf32>
    %57 = vector.shape_cast %56 : vector<2xf32> to vector<2x1xf32>
    %cst_26 = arith.constant 1.000000e-24 : f32
    %58 = vector.broadcast %cst_26 : f32 to vector<2x1xf32>
    %59 = arith.maximumf %57, %58 : vector<2x1xf32>
    %60 = math.rsqrt %59 : vector<2x1xf32>
    %61 = vector.broadcast %60 : vector<2x1xf32> to vector<2x128xf32>
    %62 = arith.mulf %54, %61 : vector<2x128xf32>
    %63 = vector.shape_cast %62 : vector<2x128xf32> to vector<1x2x128xf32>
    %c0_27 = arith.constant 0 : index
    %c0_28 = arith.constant 0 : index
    %c0_29 = arith.constant 0 : index
    %64 = vector.load %arg7[%c0_27, %c0_28, %c0_29] : memref<1x2x128xf32, #tpu.memory_space<vmem>>, vector<1x2x128xf32>
    tpu.vector_store %arg7[%c0_27, %c0_28, %c0_29], %63 {strides = array<i32>} : memref<1x2x128xf32, #tpu.memory_space<vmem>>, vector<1x2x128xf32>,
    return
  }
  func.func @transform_0(%arg0: i32) -> (i32, i32, i32) {
    %c0_i32 = arith.constant 0 : i32
    %c0_i32_0 = arith.constant 0 : i32
    %c0_i32_1 = arith.constant 0 : i32
    return %arg0, %c0_i32, %c0_i32_0 : i32, i32, i32
  }
  func.func @transform_1(%arg0: i32) -> (i32, i32, i32) {
    %c0_i32 = arith.constant 0 : i32
    %c0_i32_0 = arith.constant 0 : i32
    %c0_i32_1 = arith.constant 0 : i32
    %c0_i32_2 = arith.constant 0 : i32
    return %c0_i32, %c0_i32_0, %c0_i32_1 : i32, i32, i32
  }
  func.func @transform_2(%arg0: i32) -> (i32, i32) {
    %c0_i32 = arith.constant 0 : i32
    %c0_i32_0 = arith.constant 0 : i32
    %c0_i32_1 = arith.constant 0 : i32
    return %c0_i32, %c0_i32_0 : i32, i32
  }
  func.func @transform_3(%arg0: i32) -> (i32, i32) {
    %c0_i32 = arith.constant 0 : i32
    %c0_i32_0 = arith.constant 0 : i32
    %c0_i32_1 = arith.constant 0 : i32
    return %c0_i32, %c0_i32_0 : i32, i32
  }
  func.func @transform_4(%arg0: i32) -> (i32, i32) {
    %c0_i32 = arith.constant 0 : i32
    %c0_i32_0 = arith.constant 0 : i32
    %c0_i32_1 = arith.constant 0 : i32
    return %c0_i32, %c0_i32_0 : i32, i32
  }
  func.func @transform_5(%arg0: i32) -> (i32, i32) {
    %c0_i32 = arith.constant 0 : i32
    %c0_i32_0 = arith.constant 0 : i32
    %c0_i32_1 = arith.constant 0 : i32
    return %c0_i32, %c0_i32_0 : i32, i32
  }
  func.func @transform_6(%arg0: i32) -> (i32, i32, i32) {
    %c0_i32 = arith.constant 0 : i32
    %c0_i32_0 = arith.constant 0 : i32
    %c0_i32_1 = arith.constant 0 : i32
    return %arg0, %c0_i32, %c0_i32_0 : i32, i32, i32
  }
}

</mosaic_0001>

<llo_original>
// kernel: gnn_graph_extractor.5
$region0: #{gnn_graph_extractor.5}
  #allocation0 [shape = 'u32[]', space=smem, size = 0x4, offset = 0x4, fixed_abs, tag = 'smem constant byte address 0x4 - core index']
  #allocation1 [shape = 'u32[144,128]{1,0:T(1,128)}', space=vmem, size = 0x12000, scoped, tag = 'internal scratch']
  %s0 = inlined_call_operand.vmem [shape: f32[2,16,128], index: 0, kind: input, shape index: {}]
  %s1 = inlined_call_operand.vmem [shape: f32[1,2,128], index: 1, kind: input, shape index: {}]
  %s2 = inlined_call_operand.vmem [shape: f32[1,128], index: 2, kind: input, shape index: {}]
  %s3 = inlined_call_operand.vmem [shape: f32[1,128], index: 3, kind: input, shape index: {}]
  %s4 = inlined_call_operand.vmem [shape: bf16[128,128], index: 4, kind: input, shape index: {}]
  %s5 = inlined_call_operand.vmem [shape: f32[1,128], index: 5, kind: input, shape index: {}]
  %s6 = inlined_call_operand.hbm [shape: f32[1,2,128], index: 6, kind: output, shape index: {}]
  %s7 = sld [smem:[#allocation0]]
  $region34: #{gnn_graph_extractor.5} parent=0
    _
  %s9 = ssub.s32 1, %s7
  %s10 = scalar_select 0, %s9, %s7
  $region1: #{gnn_graph_extractor.5} parent=0
    #allocation2 [shape = 'u8[1024]{0}', space=vmem, size = 0x400, scoped, tag = 'output window, operand 0, single buffered']
    #allocation3 [shape = 's32[1]{0}', space=sflag, size = 0x4, scoped, tag = 'scoped memory for gnn_graph_extractor.5']
    %11 = vsyncpa [#allocation3], 0
    // Predicated region
    $region2: #{gnn_graph_extractor.5} parent=1 // pred_check
      _
    $region3: #{gnn_graph_extractor.5} parent=1 // pred_check_branch
      %13 = sbr.rel (0) target = $region5
    $region4: #{gnn_graph_extractor.5} parent=1 // pred_region
      _
    $region5: #{gnn_graph_extractor.5} parent=1 // pred_fallthru
      _
    // Predicated region
    $region6: #{gnn_graph_extractor.5} parent=1 // pred_check
      _
    $region7: #{gnn_graph_extractor.5} parent=1 // pred_check_branch
      %15 = sbr.rel (0) target = $region9
    $region8: #{gnn_graph_extractor.5} parent=1 // pred_region
      _
    $region9: #{gnn_graph_extractor.5} parent=1 // pred_fallthru
      _
    // Predicated region
    $region10: #{gnn_graph_extractor.5} parent=1 // pred_check
      _
    $region11: #{gnn_graph_extractor.5} parent=1 // pred_check_branch
      %17 = sbr.rel (0) target = $region13
    $region12: #{gnn_graph_extractor.5} parent=1 // pred_region
      _
    $region13: #{gnn_graph_extractor.5} parent=1 // pred_fallthru
      _
    // Predicated region
    $region14: #{gnn_graph_extractor.5} parent=1 // pred_check
      _
    $region15: #{gnn_graph_extractor.5} parent=1 // pred_check_branch
      %19 = sbr.rel (0) target = $region17
    $region16: #{gnn_graph_extractor.5} parent=1 // pred_region
      _
    $region17: #{gnn_graph_extractor.5} parent=1 // pred_fallthru
      _
    // Predicated region
    $region18: #{gnn_graph_extractor.5} parent=1 // pred_check
      _
    $region19: #{gnn_graph_extractor.5} parent=1 // pred_check_branch
      %21 = sbr.rel (0) target = $region21
    $region20: #{gnn_graph_extractor.5} parent=1 // pred_region
      _
    $region21: #{gnn_graph_extractor.5} parent=1 // pred_fallthru
      _
    // Predicated region
    $region22: #{gnn_graph_extractor.5} parent=1 // pred_check
      _
    $region23: #{gnn_graph_extractor.5} parent=1 // pred_check_branch
      %23 = sbr.rel (0) target = $region25
    $region24: #{gnn_graph_extractor.5} parent=1 // pred_region
      _
    $region25: #{gnn_graph_extractor.5} parent=1 // pred_fallthru
      _
    %v25 = vld [vmem:[%s1] sm:$0x3]
    %v26 = vadd.f32 %v25, 0.0
    %v27 = vld [vmem:[%s0] sm:$0xff]
    %v28 = vld [vmem:[%s0 + $0x8] sm:$0xff]
    %v29 = vld [vmem:[%s0 + $0x10] sm:$0xff]
    %v30 = vld [vmem:[%s0 + $0x18] sm:$0xff]
    %v31 = vld [vmem:[%s2] sm:$0x1]
    %v32 = vld [vmem:[%s3] sm:$0x1]
    %v33 = vmul.f32 %v26, 0.03125
    %v34 = vmul.f32 %v33, %v33
    %v36 = vrot.slane %v34, 7
    %v38 = vsub.f32 %v33, %v36
    %v39 = vmax.f32 %v38, 0.0
    %v40 = vadd.f32 %v39, 1e-05
    %v41 = vrsqrt.pop %v40
    %v44 = vunpack.c.l.s4 1966171168
    %v45 = vunpack.c.0.s8 %v44
    %v46 = vlaneseq
    %v47 = vshrl.u32 %v46, 7
    %v48 = vsub.s32 %v45, %v47
    %v49 = vrot.slane %v41, %v48
    %v50 = vcombine.high %v49, %v49
    %v52 = vunpack.c.l.s4 1966171168
    %v53 = vunpack.c.0.s8 %v52
    %v54 = vlaneseq
    %v55 = vshrl.u32 %v54, 7
    %v56 = vsub.s32 %v53, %v55
    %v57 = vrot.slane %v50, %v56
    %v59 = vmul.f32 %v31, %v57
    %v60 = vmul.f32 %v33, %v59
    %v61 = vsub.f32 %v32, %v60
    %v63 = vlaneseq
    %v64 = vshrl.u32 %v63, 7
    %v65 = vsub.s32 0, %v64
    %v66 = vrot.slane %v59, %v65
    %v68 = vmul.f32 %v27, %v66
    %v69 = vmul.f32 %v28, %v66
    %v70 = vmul.f32 %v29, %v66
    %v71 = vmul.f32 %v30, %v66
    %v73 = vlaneseq
    %v74 = vshrl.u32 %v73, 7
    %v75 = vsub.s32 0, %v74
    %v76 = vrot.slane %v61, %v75
    %v78 = vadd.f32 %v68, %v76
    %v79 = vadd.f32 %v69, %v76
    %v80 = vadd.f32 %v70, %v76
    %v81 = vadd.f32 %v71, %v76
    %v82 = vmul.f32 %v78, 0.01
    %v83 = vmul.f32 %v79, 0.01
    %v84 = vmul.f32 %v80, 0.01
    %v85 = vmul.f32 %v81, 0.01
    %v86 = vmax.f32 %v78, %v82
    %v87 = vmax.f32 %v79, %v83
    %v88 = vmax.f32 %v80, %v84
    %v89 = vmax.f32 %v81, %v85
    %v90 = vpack.c.bf16 %v87, %v86
    %v91 = vpack.c.bf16 %v89, %v88
    %v92 = vld [vmem:[%s4] sm:$0xf]
    %v93 = vld [vmem:[%s4 + $0x4] sm:$0xf]
    %v94 = vld [vmem:[%s4 + $0x8] sm:$0xf]
    %v95 = vld [vmem:[%s4 + $0xc] sm:$0xf]
    %v96 = vld [vmem:[%s4 + $0x10] sm:$0xf]
    %v97 = vld [vmem:[%s4 + $0x14] sm:$0xf]
    %v98 = vld [vmem:[%s4 + $0x18] sm:$0xf]
    %v99 = vld [vmem:[%s4 + $0x1c] sm:$0xf]
    %v100 = vld [vmem:[%s4 + $0x20] sm:$0xf]
    %v101 = vld [vmem:[%s4 + $0x24] sm:$0xf]
    %v102 = vld [vmem:[%s4 + $0x28] sm:$0xf]
    %v103 = vld [vmem:[%s4 + $0x2c] sm:$0xf]
    %v104 = vld [vmem:[%s4 + $0x30] sm:$0xf]
    %v105 = vld [vmem:[%s4 + $0x34] sm:$0xf]
    %v106 = vld [vmem:[%s4 + $0x38] sm:$0xf]
    %v107 = vld [vmem:[%s4 + $0x3c] sm:$0xf]
    %v108 = vld [vmem:[%s5] sm:$0x1]
    %v110 = vlaneseq
    %v111 = vshrl.u32 %v110, 7
    %v112 = vsub.s32 0, %v111
    %v113 = vrot.slane %v108, %v112
    %v131 = vunpack.c.l.b16 %v92
    %v132 = vunpack.c.l.b16 %v93
    %v133 = vunpack.c.l.b16 %v94
    %v134 = vunpack.c.l.b16 %v95
    %v135 = vunpack.c.l.b16 %v96
    %v136 = vunpack.c.l.b16 %v97
    %v137 = vunpack.c.l.b16 %v98
    %v138 = vunpack.c.l.b16 %v99
    %v139 = vunpack.c.l.b16 %v100
    %v140 = vunpack.c.l.b16 %v101
    %v141 = vunpack.c.l.b16 %v102
    %v142 = vunpack.c.l.b16 %v103
    %v143 = vunpack.c.l.b16 %v104
    %v144 = vunpack.c.l.b16 %v105
    %v145 = vunpack.c.l.b16 %v106
    %v146 = vunpack.c.l.b16 %v107
    %v147 = vpack.c.b16 %v132, %v131
    %v148 = vpack.c.b16 %v134, %v133
    %v149 = vpack.c.b16 %v136, %v135
    %v150 = vpack.c.b16 %v138, %v137
    %v151 = vpack.c.b16 %v140, %v139
    %v152 = vpack.c.b16 %v142, %v141
    %v153 = vpack.c.b16 %v144, %v143
    %v154 = vpack.c.b16 %v146, %v145
    %163 = vmatprep.subr.bf16.mxu0 0
    %164 = vmatpush1.bf16.msra.mxu0 %v147
    %165 = vmatprep.subr.bf16.mxu0 0
    %166 = vmatpush1.bf16.msra.mxu0 %v148
    %167 = vmatprep.subr.bf16.mxu0 0
    %168 = vmatpush1.bf16.msra.mxu0 %v149
    %169 = vmatprep.subr.bf16.mxu0 0
    %170 = vmatpush1.bf16.msra.mxu0 %v150
    %171 = vmatprep.subr.bf16.mxu0 0
    %172 = vmatpush1.bf16.msra.mxu0 %v151
    %173 = vmatprep.subr.bf16.mxu0 0
    %174 = vmatpush1.bf16.msra.mxu0 %v152
    %175 = vmatprep.subr.bf16.mxu0 0
    %176 = vmatpush1.bf16.msra.mxu0 %v153
    %177 = vmatprep.subr.bf16.mxu0 0
    %178 = vmatpush1.bf16.msra.mxu0 %v154
    %179 = vmatprep.subr.bf16.mxu0 0
    %180 = vmatpush1.bf16.msra.mxu0 0
    %181 = vmatprep.subr.bf16.mxu0 0
    %182 = vmatpush1.bf16.msra.mxu0 0
    %183 = vmatprep.subr.bf16.mxu0 0
    %184 = vmatpush1.bf16.msra.mxu0 0
    %185 = vmatprep.subr.bf16.mxu0 0
    %186 = vmatpush1.bf16.msra.mxu0 0
    %187 = vmatprep.subr.bf16.mxu0 0
    %188 = vmatpush1.bf16.msra.mxu0 0
    %189 = vmatprep.subr.bf16.mxu0 0
    %190 = vmatpush1.bf16.msra.mxu0 0
    %191 = vmatprep.subr.bf16.mxu0 0
    %192 = vmatpush1.bf16.msra.mxu0 0
    %193 = vmatprep.subr.bf16.mxu0 0
    %194 = vmatpush1.bf16.msra.mxu0 0
    %195 = vmatprep.mubr.bf16.mxu0 0
    %196 = vmatmul.mubr.bf16.gmra.mrb[0].mxu0 %v90
    %v197 = vpop.f32.mrb[0].mxu0
    %v198 = vadd.f32 %v113, %v197
    %v199 = vpop.f32.mrb[0].mxu0
    %v200 = vpop.f32.mrb[0].mxu0
    %v201 = vadd.f32 %v113, %v200
    %v202 = vpop.f32.mrb[0].mxu0
    %203 = vmatprep.mubr.bf16.mxu0 0
    %204 = vmatmul.mubr.bf16.gmra.mrb[0].mxu0 %v91
    %v205 = vpop.f32.mrb[0].mxu0
    %v206 = vadd.f32 %v113, %v205
    %v207 = vpop.f32.mrb[0].mxu0
    %v208 = vpop.f32.mrb[0].mxu0
    %v209 = vadd.f32 %v113, %v208
    %v210 = vpop.f32.mrb[0].mxu0
    %211 = vdwg.mxu0
    %212 = vmax.xlane.f32.xlu0 %v198
    %v213 = vpop.xlane.xlu0 %212
    %214 = vmax.xlane.f32.xlu0 %v201
    %v215 = vpop.xlane.xlu0 %214
    %216 = vmax.xlane.f32.xlu0 %v206
    %v217 = vpop.xlane.xlu0 %216
    %218 = vmax.xlane.f32.xlu0 %v209
    %v219 = vpop.xlane.xlu0 %218
    %v220 = vsub.f32 %v198, %v213
    %v221 = vsub.f32 %v201, %v215
    %v222 = vsub.f32 %v206, %v217
    %v223 = vsub.f32 %v209, %v219
    %v224 = vmul.f32 %v220, 1.442695
    %v225 = vpow.pop %v224
    %v226 = vmul.f32 %v221, 1.442695
    %v227 = vpow.pop %v226
    %v228 = vmul.f32 %v222, 1.442695
    %v229 = vpow.pop %v228
    %v230 = vmul.f32 %v223, 1.442695
    %v231 = vpow.pop %v230
    %232 = vadd.xlane.f32.xlu0 %v225
    %v233 = vpop.xlane.xlu0 %232
    %234 = vadd.xlane.f32.xlu0 %v227
    %v235 = vpop.xlane.xlu0 %234
    %236 = vadd.xlane.f32.xlu0 %v229
    %v237 = vpop.xlane.xlu0 %236
    %238 = vadd.xlane.f32.xlu0 %v231
    %v239 = vpop.xlane.xlu0 %238
    %v240 = vrcp.pop %v233
    %v241 = vmul.f32 %v225, %v240
    %v242 = vrcp.pop %v235
    %v243 = vmul.f32 %v227, %v242
    %v244 = vrcp.pop %v237
    %v245 = vmul.f32 %v229, %v244
    %v246 = vrcp.pop %v239
    %v247 = vmul.f32 %v231, %v246
    %v248 = vpack.c.bf16 %v243, %v241
    %v249 = vpack.c.bf16 %v247, %v245
    %250 = vxpose.xlu0.c.b16.start [1/8] %v248, 128
    %251 = vxpose.xlu0.c.b16.cont [2/8] 0, 128
    %252 = vxpose.xlu0.c.b16.cont [3/8] 0, 128
    %253 = vxpose.xlu0.c.b16.cont [4/8] 0, 128
    %254 = vxpose.xlu0.c.b16.cont [5/8] 0, 128
    %255 = vxpose.xlu0.c.b16.cont [6/8] 0, 128
    %256 = vxpose.xlu0.c.b16.cont [7/8] 0, 128
    %257 = vxpose.xlu0.c.b16.end [8/8] 0, 128
    %v258 = vpop.trf.xlu0
    %v259 = vpop.trf.xlu0
    %v260 = vpop.trf.xlu0
    %v261 = vpop.trf.xlu0
    %v262 = vpop.trf.xlu0
    %v263 = vpop.trf.xlu0
    %v264 = vpop.trf.xlu0
    %v265 = vpop.trf.xlu0
    %vm266 = vcmask 130048
    %v268 = vsel %vm266, %v258, 0
    %v271 = vsel %vm266, %v259, 0
    %v274 = vsel %vm266, %v260, 0
    %v277 = vsel %vm266, %v261, 0
    %v280 = vsel %vm266, %v262, 0
    %v283 = vsel %vm266, %v263, 0
    %v286 = vsel %vm266, %v264, 0
    %v289 = vsel %vm266, %v265, 0
    %291 = vmatprep.subr.bf16.mxu0 0
    %292 = vmatpush1.bf16.msra.mxu0 %v90
    %293 = vmatprep.subr.bf16.mxu0 0
    %294 = vmatpush1.bf16.msra.mxu0 0
    %295 = vmatprep.subr.bf16.mxu0 0
    %296 = vmatpush1.bf16.msra.mxu0 0
    %297 = vmatprep.subr.bf16.mxu0 0
    %298 = vmatpush1.bf16.msra.mxu0 0
    %299 = vmatprep.subr.bf16.mxu0 0
    %300 = vmatpush1.bf16.msra.mxu0 0
    %301 = vmatprep.subr.bf16.mxu0 0
    %302 = vmatpush1.bf16.msra.mxu0 0
    %303 = vmatprep.subr.bf16.mxu0 0
    %304 = vmatpush1.bf16.msra.mxu0 0
    %305 = vmatprep.subr.bf16.mxu0 0
    %306 = vmatpush1.bf16.msra.mxu0 0
    %307 = vmatprep.subr.bf16.mxu0 0
    %308 = vmatpush1.bf16.msra.mxu0 0
    %309 = vmatprep.subr.bf16.mxu0 0
    %310 = vmatpush1.bf16.msra.mxu0 0
    %311 = vmatprep.subr.bf16.mxu0 0
    %312 = vmatpush1.bf16.msra.mxu0 0
    %313 = vmatprep.subr.bf16.mxu0 0
    %314 = vmatpush1.bf16.msra.mxu0 0
    %315 = vmatprep.subr.bf16.mxu0 0
    %316 = vmatpush1.bf16.msra.mxu0 0
    %317 = vmatprep.subr.bf16.mxu0 0
    %318 = vmatpush1.bf16.msra.mxu0 0
    %319 = vmatprep.subr.bf16.mxu0 0
    %320 = vmatpush1.bf16.msra.mxu0 0
    %321 = vmatprep.subr.bf16.mxu0 0
    %322 = vmatpush1.bf16.msra.mxu0 0
    %323 = vmatprep.mubr.bf16.mxu0 0
    %324 = vmatmul.mubr.bf16.gmra.mrb[0].mxu0 %v268
    %v325 = vpop.f32.mrb[0].mxu0
    %v326 = vadd.f32 0.0, %v325
    %v327 = vpop.f32.mrb[0].mxu0
    %v328 = vpop.f32.mrb[0].mxu0
    %v329 = vadd.f32 0.0, %v328
    %v330 = vpop.f32.mrb[0].mxu0
    %331 = vmatprep.mubr.bf16.mxu0 0
    %332 = vmatmul.mubr.bf16.gmra.mrb[0].mxu0 %v271
    %v333 = vpop.f32.mrb[0].mxu0
    %v334 = vadd.f32 0.0, %v333
    %v335 = vpop.f32.mrb[0].mxu0
    %v336 = vpop.f32.mrb[0].mxu0
    %v337 = vadd.f32 0.0, %v336
    %v338 = vpop.f32.mrb[0].mxu0
    %339 = vmatprep.mubr.bf16.mxu0 0
    %340 = vmatmul.mubr.bf16.gmra.mrb[0].mxu0 %v274
    %v341 = vpop.f32.mrb[0].mxu0
    %v342 = vadd.f32 0.0, %v341
    %v343 = vpop.f32.mrb[0].mxu0
    %v344 = vpop.f32.mrb[0].mxu0
    %v345 = vadd.f32 0.0, %v344
    %v346 = vpop.f32.mrb[0].mxu0
    %347 = vmatprep.mubr.bf16.mxu0 0
    %348 = vmatmul.mubr.bf16.gmra.mrb[0].mxu0 %v277
    %v349 = vpop.f32.mrb[0].mxu0
    %v350 = vadd.f32 0.0, %v349
    %v351 = vpop.f32.mrb[0].mxu0
    %v352 = vpop.f32.mrb[0].mxu0
    %v353 = vadd.f32 0.0, %v352
    %v354 = vpop.f32.mrb[0].mxu0
    %355 = vmatprep.mubr.bf16.mxu0 0
    %356 = vmatmul.mubr.bf16.gmra.mrb[0].mxu0 %v280
    %v357 = vpop.f32.mrb[0].mxu0
    %v358 = vadd.f32 0.0, %v357
    %v359 = vpop.f32.mrb[0].mxu0
    %v360 = vpop.f32.mrb[0].mxu0
    %v361 = vadd.f32 0.0, %v360
    %v362 = vpop.f32.mrb[0].mxu0
    %363 = vmatprep.mubr.bf16.mxu0 0
    %364 = vmatmul.mubr.bf16.gmra.mrb[0].mxu0 %v283
    %v365 = vpop.f32.mrb[0].mxu0
    %v366 = vadd.f32 0.0, %v365
    %v367 = vpop.f32.mrb[0].mxu0
    %v368 = vpop.f32.mrb[0].mxu0
    %v369 = vadd.f32 0.0, %v368
    %v370 = vpop.f32.mrb[0].mxu0
    %371 = vmatprep.mubr.bf16.mxu0 0
    %372 = vmatmul.mubr.bf16.gmra.mrb[0].mxu0 %v286
    %v373 = vpop.f32.mrb[0].mxu0
    %v374 = vadd.f32 0.0, %v373
    %v375 = vpop.f32.mrb[0].mxu0
    %v376 = vpop.f32.mrb[0].mxu0
    %v377 = vadd.f32 0.0, %v376
    %v378 = vpop.f32.mrb[0].mxu0
    %379 = vmatprep.mubr.bf16.mxu0 0
    %380 = vmatmul.mubr.bf16.gmra.mrb[0].mxu0 %v289
    %v381 = vpop.f32.mrb[0].mxu0
    %v382 = vadd.f32 0.0, %v381
    %v383 = vpop.f32.mrb[0].mxu0
    %v384 = vpop.f32.mrb[0].mxu0
    %v385 = vadd.f32 0.0, %v384
    %v386 = vpop.f32.mrb[0].mxu0
    %387 = vdwg.mxu0
    %388 = vxpose.xlu0.c.b16.start [1/8] %v249, 128
    %389 = vxpose.xlu0.c.b16.cont [2/8] 0, 128
    %390 = vxpose.xlu0.c.b16.cont [3/8] 0, 128
    %391 = vxpose.xlu0.c.b16.cont [4/8] 0, 128
    %392 = vxpose.xlu0.c.b16.cont [5/8] 0, 128
    %393 = vxpose.xlu0.c.b16.cont [6/8] 0, 128
    %394 = vxpose.xlu0.c.b16.cont [7/8] 0, 128
    %395 = vxpose.xlu0.c.b16.end [8/8] 0, 128
    %v396 = vpop.trf.xlu0
    %v397 = vpop.trf.xlu0
    %v398 = vpop.trf.xlu0
    %v399 = vpop.trf.xlu0
    %v400 = vpop.trf.xlu0
    %v401 = vpop.trf.xlu0
    %v402 = vpop.trf.xlu0
    %v403 = vpop.trf.xlu0
    %v405 = vsel %vm266, %v396, 0
    %v408 = vsel %vm266, %v397, 0
    %v411 = vsel %vm266, %v398, 0
    %v414 = vsel %vm266, %v399, 0
    %v417 = vsel %vm266, %v400, 0
    %v420 = vsel %vm266, %v401, 0
    %v423 = vsel %vm266, %v402, 0
    %v426 = vsel %vm266, %v403, 0
    %428 = vmatprep.subr.bf16.mxu0 0
    %429 = vmatpush1.bf16.msra.mxu0 %v91
    %430 = vmatprep.subr.bf16.mxu0 0
    %431 = vmatpush1.bf16.msra.mxu0 0
    %432 = vmatprep.subr.bf16.mxu0 0
    %433 = vmatpush1.bf16.msra.mxu0 0
    %434 = vmatprep.subr.bf16.mxu0 0
    %435 = vmatpush1.bf16.msra.mxu0 0
    %436 = vmatprep.subr.bf16.mxu0 0
    %437 = vmatpush1.bf16.msra.mxu0 0
    %438 = vmatprep.subr.bf16.mxu0 0
    %439 = vmatpush1.bf16.msra.mxu0 0
    %440 = vmatprep.subr.bf16.mxu0 0
    %441 = vmatpush1.bf16.msra.mxu0 0
    %442 = vmatprep.subr.bf16.mxu0 0
    %443 = vmatpush1.bf16.msra.mxu0 0
    %444 = vmatprep.subr.bf16.mxu0 0
    %445 = vmatpush1.bf16.msra.mxu0 0
    %446 = vmatprep.subr.bf16.mxu0 0
    %447 = vmatpush1.bf16.msra.mxu0 0
    %448 = vmatprep.subr.bf16.mxu0 0
    %449 = vmatpush1.bf16.msra.mxu0 0
    %450 = vmatprep.subr.bf16.mxu0 0
    %451 = vmatpush1.bf16.msra.mxu0 0
    %452 = vmatprep.subr.bf16.mxu0 0
    %453 = vmatpush1.bf16.msra.mxu0 0
    %454 = vmatprep.subr.bf16.mxu0 0
    %455 = vmatpush1.bf16.msra.mxu0 0
    %456 = vmatprep.subr.bf16.mxu0 0
    %457 = vmatpush1.bf16.msra.mxu0 0
    %458 = vmatprep.subr.bf16.mxu0 0
    %459 = vmatpush1.bf16.msra.mxu0 0
    %460 = vmatprep.mubr.bf16.mxu0 0
    %461 = vmatmul.mubr.bf16.gmra.mrb[0].mxu0 %v405
    %v462 = vpop.f32.mrb[0].mxu0
    %v463 = vadd.f32 0.0, %v462
    %v464 = vpop.f32.mrb[0].mxu0
    %v465 = vpop.f32.mrb[0].mxu0
    %v466 = vadd.f32 0.0, %v465
    %v467 = vpop.f32.mrb[0].mxu0
    %468 = vmatprep.mubr.bf16.mxu0 0
    %469 = vmatmul.mubr.bf16.gmra.mrb[0].mxu0 %v408
    %v470 = vpop.f32.mrb[0].mxu0
    %v471 = vadd.f32 0.0, %v470
    %v472 = vpop.f32.mrb[0].mxu0
    %v473 = vpop.f32.mrb[0].mxu0
    %v474 = vadd.f32 0.0, %v473
    %v475 = vpop.f32.mrb[0].mxu0
    %476 = vmatprep.mubr.bf16.mxu0 0
    %477 = vmatmul.mubr.bf16.gmra.mrb[0].mxu0 %v411
    %v478 = vpop.f32.mrb[0].mxu0
    %v479 = vadd.f32 0.0, %v478
    %v480 = vpop.f32.mrb[0].mxu0
    %v481 = vpop.f32.mrb[0].mxu0
    %v482 = vadd.f32 0.0, %v481
    %v483 = vpop.f32.mrb[0].mxu0
    %484 = vmatprep.mubr.bf16.mxu0 0
    %485 = vmatmul.mubr.bf16.gmra.mrb[0].mxu0 %v414
    %v486 = vpop.f32.mrb[0].mxu0
    %v487 = vadd.f32 0.0, %v486
    %v488 = vpop.f32.mrb[0].mxu0
    %v489 = vpop.f32.mrb[0].mxu0
    %v490 = vadd.f32 0.0, %v489
    %v491 = vpop.f32.mrb[0].mxu0
    %492 = vmatprep.mubr.bf16.mxu0 0
    %493 = vmatmul.mubr.bf16.gmra.mrb[0].mxu0 %v417
    %v494 = vpop.f32.mrb[0].mxu0
    %v495 = vadd.f32 0.0, %v494
    %v496 = vpop.f32.mrb[0].mxu0
    %v497 = vpop.f32.mrb[0].mxu0
    %v498 = vadd.f32 0.0, %v497
    %v499 = vpop.f32.mrb[0].mxu0
    %500 = vmatprep.mubr.bf16.mxu0 0
    %501 = vmatmul.mubr.bf16.gmra.mrb[0].mxu0 %v420
    %v502 = vpop.f32.mrb[0].mxu0
    %v503 = vadd.f32 0.0, %v502
    %v504 = vpop.f32.mrb[0].mxu0
    %v505 = vpop.f32.mrb[0].mxu0
    %v506 = vadd.f32 0.0, %v505
    %v507 = vpop.f32.mrb[0].mxu0
    %508 = vmatprep.mubr.bf16.mxu0 0
    %509 = vmatmul.mubr.bf16.gmra.mrb[0].mxu0 %v423
    %v510 = vpop.f32.mrb[0].mxu0
    %v511 = vadd.f32 0.0, %v510
    %v512 = vpop.f32.mrb[0].mxu0
    %v513 = vpop.f32.mrb[0].mxu0
    %v514 = vadd.f32 0.0, %v513
    %v515 = vpop.f32.mrb[0].mxu0
    %516 = vmatprep.mubr.bf16.mxu0 0
    %517 = vmatmul.mubr.bf16.gmra.mrb[0].mxu0 %v426
    %v518 = vpop.f32.mrb[0].mxu0
    %v519 = vadd.f32 0.0, %v518
    %v520 = vpop.f32.mrb[0].mxu0
    %v521 = vpop.f32.mrb[0].mxu0
    %v522 = vadd.f32 0.0, %v521
    %v523 = vpop.f32.mrb[0].mxu0
    %524 = vdwg.mxu0
    %v525 = vmul.f32 %v326, 0.01
    %v526 = vmul.f32 %v329, 0.01
    %v527 = vmul.f32 %v334, 0.01
    %v528 = vmul.f32 %v337, 0.01
    %v529 = vmul.f32 %v342, 0.01
    %v530 = vmul.f32 %v345, 0.01
    %v531 = vmul.f32 %v350, 0.01
    %v532 = vmul.f32 %v353, 0.01
    %v533 = vmul.f32 %v358, 0.01
    %v534 = vmul.f32 %v361, 0.01
    %v535 = vmul.f32 %v366, 0.01
    %v536 = vmul.f32 %v369, 0.01
    %v537 = vmul.f32 %v374, 0.01
    %v538 = vmul.f32 %v377, 0.01
    %v539 = vmul.f32 %v382, 0.01
    %v540 = vmul.f32 %v385, 0.01
    %v541 = vmul.f32 %v463, 0.01
    %v542 = vmul.f32 %v466, 0.01
    %v543 = vmul.f32 %v471, 0.01
    %v544 = vmul.f32 %v474, 0.01
    %v545 = vmul.f32 %v479, 0.01
    %v546 = vmul.f32 %v482, 0.01
    %v547 = vmul.f32 %v487, 0.01
    %v548 = vmul.f32 %v490, 0.01
    %v549 = vmul.f32 %v495, 0.01
    %v550 = vmul.f32 %v498, 0.01
    %v551 = vmul.f32 %v503, 0.01
    %v552 = vmul.f32 %v506, 0.01
    %v553 = vmul.f32 %v511, 0.01
    %v554 = vmul.f32 %v514, 0.01
    %v555 = vmul.f32 %v519, 0.01
    %v556 = vmul.f32 %v522, 0.01
    %v557 = vmax.f32 %v326, %v525
    %v558 = vmax.f32 %v329, %v526
    %v559 = vmax.f32 %v334, %v527
    %v560 = vmax.f32 %v337, %v528
    %v561 = vmax.f32 %v342, %v529
    %v562 = vmax.f32 %v345, %v530
    %v563 = vmax.f32 %v350, %v531
    %v564 = vmax.f32 %v353, %v532
    %v565 = vmax.f32 %v358, %v533
    %v566 = vmax.f32 %v361, %v534
    %v567 = vmax.f32 %v366, %v535
    %v568 = vmax.f32 %v369, %v536
    %v569 = vmax.f32 %v374, %v537
    %v570 = vmax.f32 %v377, %v538
    %v571 = vmax.f32 %v382, %v539
    %v572 = vmax.f32 %v385, %v540
    %v573 = vmax.f32 %v463, %v541
    %v574 = vmax.f32 %v466, %v542
    %v575 = vmax.f32 %v471, %v543
    %v576 = vmax.f32 %v474, %v544
    %v577 = vmax.f32 %v479, %v545
    %v578 = vmax.f32 %v482, %v546
    %v579 = vmax.f32 %v487, %v547
    %v580 = vmax.f32 %v490, %v548
    %v581 = vmax.f32 %v495, %v549
    %v582 = vmax.f32 %v498, %v550
    %v583 = vmax.f32 %v503, %v551
    %v584 = vmax.f32 %v506, %v552
    %v585 = vmax.f32 %v511, %v553
    %v586 = vmax.f32 %v514, %v554
    %v587 = vmax.f32 %v519, %v555
    %v588 = vmax.f32 %v522, %v556
    %v589 = vadd.f32 %v557, %v558
    %v590 = vadd.f32 %v589, %v559
    %v591 = vadd.f32 %v590, %v560
    %v592 = vadd.f32 %v591, %v561
    %v593 = vadd.f32 %v592, %v562
    %v594 = vadd.f32 %v593, %v563
    %v595 = vadd.f32 %v594, %v564
    %v596 = vadd.f32 %v595, %v565
    %v597 = vadd.f32 %v596, %v566
    %v598 = vadd.f32 %v597, %v567
    %v599 = vadd.f32 %v598, %v568
    %v600 = vadd.f32 %v599, %v569
    %v601 = vadd.f32 %v600, %v570
    %v602 = vadd.f32 %v601, %v571
    %v603 = vadd.f32 %v602, %v572
    %v604 = vrot.slane %v603, 4
    %v605 = vadd.f32 %v603, %v604
    %v606 = vrot.slane %v605, 2
    %v607 = vadd.f32 %v605, %v606
    %v608 = vrot.slane %v607, 1
    %v609 = vadd.f32 %v607, %v608
    %v610 = vadd.f32 %v573, %v574
    %v611 = vadd.f32 %v610, %v575
    %v612 = vadd.f32 %v611, %v576
    %v613 = vadd.f32 %v612, %v577
    %v614 = vadd.f32 %v613, %v578
    %v615 = vadd.f32 %v614, %v579
    %v616 = vadd.f32 %v615, %v580
    %v617 = vadd.f32 %v616, %v581
    %v618 = vadd.f32 %v617, %v582
    %v619 = vadd.f32 %v618, %v583
    %v620 = vadd.f32 %v619, %v584
    %v621 = vadd.f32 %v620, %v585
    %v622 = vadd.f32 %v621, %v586
    %v623 = vadd.f32 %v622, %v587
    %v624 = vadd.f32 %v623, %v588
    %v625 = vrot.slane %v624, 4
    %v626 = vadd.f32 %v624, %v625
    %v627 = vrot.slane %v626, 2
    %v628 = vadd.f32 %v626, %v627
    %v629 = vrot.slane %v628, 1
    %v630 = vadd.f32 %v628, %v629
    %v631 = vmul.f32 %v609, 0.5
    %v632 = vmul.f32 %v630, 0.5
    %v633 = vmul.f32 %v631, %v631
    %v634 = vmul.f32 %v632, %v632
    %vm637 = vcmask 1041409
    %v638 = vsel %vm637, %v634, %v633
    %vm640 = vcmask 1041408
    %v641 = vsel %vm640, %v638, 0.0
    %642 = vadd.xlane.f32.xlu0 %v641
    %v643 = vpop.xlane.xlu0 %642
    %v644 = vmax.f32 %v643, 1e-24
    %v645 = vrsqrt.pop %v644
    %v647 = vrot.slane %v645, 1
    %v650 = vmul.f32 %v631, %v645
    %v651 = vmul.f32 %v632, %v647
    %v654 = vrot.slane %v651, 7
    %v655 = vsel %vm637, %v654, %v650
    %657 = vst [vmem:[#allocation2] sm:$0x3] %v655
    // Predicated region
    $region26: #{gnn_graph_extractor.5} parent=1 // pred_check
      _
    $region27: #{gnn_graph_extractor.5} parent=1 // pred_check_branch
      %659 = sbr.rel (0) target = $region29
    $region28: #{gnn_graph_extractor.5} parent=1 // pred_region
      %s661 = ssub.s32 32, 32
      %662 = vsyncadd [#allocation3], %s661
      %s664 = sshll.u32 [#allocation2], 4
      %s665 = int_to_ptr.vmem [resolvable:$true] %s664
      %667 = dma.vmem_to_hbm [thread:$0]  %s665, 32, %s6, [#allocation3]
    $region29: #{gnn_graph_extractor.5} parent=1 // pred_fallthru
      _
    // Predicated region
    $region30: #{gnn_graph_extractor.5} parent=1 // pred_check
      _
    $region31: #{gnn_graph_extractor.5} parent=1 // pred_check_branch
      %669 = sbr.rel (0) target = $region33
    $region32: #{gnn_graph_extractor.5} parent=1 // pred_region
      %670 = dma.done [#allocation3], 32
    $region33: #{gnn_graph_extractor.5} parent=1 // pred_fallthru
      _
    %671 = vsyncpa [#allocation3], 1

// kernel: gnn_graph_extractor.3
$region0: #{gnn_graph_extractor.3}
  #allocation0 [shape = 'u32[]', space=smem, size = 0x4, offset = 0x4, fixed_abs, tag = 'smem constant byte address 0x4 - core index']
  #allocation1 [shape = 'u32[144,128]{1,0:T(1,128)}', space=vmem, size = 0x12000, scoped, tag = 'internal scratch']
  %s0 = inlined_call_operand.vmem [shape: bf16[2,16,128], index: 0, kind: input, shape index: {}]
  %s1 = inlined_call_operand.vmem [shape: bf16[2,16,16], index: 1, kind: input, shape index: {}]
  %s2 = inlined_call_operand.vmem [shape: bf16[128,128], index: 2, kind: input, shape index: {}]
  %s3 = inlined_call_operand.vmem [shape: f32[1,128], index: 3, kind: input, shape index: {}]
  %s4 = inlined_call_operand.vmem [shape: bf16[128,128], index: 4, kind: input, shape index: {}]
  %s5 = inlined_call_operand.vmem [shape: bf16[128,128], index: 5, kind: input, shape index: {}]
  %s6 = inlined_call_operand.vmem [shape: f32[1,128], index: 6, kind: input, shape index: {}]
  %s7 = inlined_call_operand.vmem [shape: f32[2,16,128], index: 7, kind: output, shape index: {0}]
  %s8 = inlined_call_operand.vmem [shape: f32[1,2,128], index: 8, kind: output, shape index: {1}]
  %9 = xla_tuple %s7, %s8
  %s10 = sld [smem:[#allocation0]]
  $region46: #{gnn_graph_extractor.3} parent=0
    _
  %s12 = ssub.s32 1, %s10
  %s13 = scalar_select 0, %s12, %s10
  // Predicated region
  $region2: #{gnn_graph_extractor.3} parent=0 // pred_check
    _
  $region3: #{gnn_graph_extractor.3} parent=0 // pred_check_branch
    %15 = sbr.rel (0) target = $region5
  $region4: #{gnn_graph_extractor.3} parent=0 // pred_region
    _
  $region5: #{gnn_graph_extractor.3} parent=0 // pred_fallthru
    _
  // Predicated region
  $region6: #{gnn_graph_extractor.3} parent=0 // pred_check
    _
  $region7: #{gnn_graph_extractor.3} parent=0 // pred_check_branch
    %17 = sbr.rel (0) target = $region9
  $region8: #{gnn_graph_extractor.3} parent=0 // pred_region
    _
  $region9: #{gnn_graph_extractor.3} parent=0 // pred_fallthru
    _
  // Predicated region
  $region10: #{gnn_graph_extractor.3} parent=0 // pred_check
    _
  $region11: #{gnn_graph_extractor.3} parent=0 // pred_check_branch
    %19 = sbr.rel (0) target = $region13
  $region12: #{gnn_graph_extractor.3} parent=0 // pred_region
    _
  $region13: #{gnn_graph_extractor.3} parent=0 // pred_fallthru
    _
  // Predicated region
  $region14: #{gnn_graph_extractor.3} parent=0 // pred_check
    _
  $region15: #{gnn_graph_extractor.3} parent=0 // pred_check_branch
    %21 = sbr.rel (0) target = $region17
  $region16: #{gnn_graph_extractor.3} parent=0 // pred_region
    _
  $region17: #{gnn_graph_extractor.3} parent=0 // pred_fallthru
    _
  // Predicated region
  $region18: #{gnn_graph_extractor.3} parent=0 // pred_check
    _
  $region19: #{gnn_graph_extractor.3} parent=0 // pred_check_branch
    %23 = sbr.rel (0) target = $region21
  $region20: #{gnn_graph_extractor.3} parent=0 // pred_region
    _
  $region21: #{gnn_graph_extractor.3} parent=0 // pred_fallthru
    _
  // Predicated region
  $region22: #{gnn_graph_extractor.3} parent=0 // pred_check
    _
  $region23: #{gnn_graph_extractor.3} parent=0 // pred_check_branch
    %25 = sbr.rel (0) target = $region25
  $region24: #{gnn_graph_extractor.3} parent=0 // pred_region
    _
  $region25: #{gnn_graph_extractor.3} parent=0 // pred_fallthru
    _
  // Predicated region
  $region26: #{gnn_graph_extractor.3} parent=0 // pred_check
    _
  $region27: #{gnn_graph_extractor.3} parent=0 // pred_check_branch
    %27 = sbr.rel (0) target = $region29
  $region28: #{gnn_graph_extractor.3} parent=0 // pred_region
    _
  $region29: #{gnn_graph_extractor.3} parent=0 // pred_fallthru
    _
  %v29 = vld [vmem:[%s0] sm:$0xf]
  %v30 = vld [vmem:[%s0 + $0x4] sm:$0xf]
  %v31 = vld [vmem:[%s0 + $0x8] sm:$0xf]
  %v32 = vld [vmem:[%s0 + $0xc] sm:$0xf]
  %v33 = vld [vmem:[%s2] sm:$0xf]
  %v34 = vld [vmem:[%s2 + $0x4] sm:$0xf]
  %v35 = vld [vmem:[%s2 + $0x8] sm:$0xf]
  %v36 = vld [vmem:[%s2 + $0xc] sm:$0xf]
  %v37 = vld [vmem:[%s2 + $0x10] sm:$0xf]
  %v38 = vld [vmem:[%s2 + $0x14] sm:$0xf]
  %v39 = vld [vmem:[%s2 + $0x18] sm:$0xf]
  %v40 = vld [vmem:[%s2 + $0x1c] sm:$0xf]
  %v41 = vld [vmem:[%s2 + $0x20] sm:$0xf]
  %v42 = vld [vmem:[%s2 + $0x24] sm:$0xf]
  %v43 = vld [vmem:[%s2 + $0x28] sm:$0xf]
  %v44 = vld [vmem:[%s2 + $0x2c] sm:$0xf]
  %v45 = vld [vmem:[%s2 + $0x30] sm:$0xf]
  %v46 = vld [vmem:[%s2 + $0x34] sm:$0xf]
  %v47 = vld [vmem:[%s2 + $0x38] sm:$0xf]
  %v48 = vld [vmem:[%s2 + $0x3c] sm:$0xf]
  %v49 = vld [vmem:[%s3] sm:$0x1]
  %v51 = vlaneseq
  %v52 = vshrl.u32 %v51, 7
  %v53 = vsub.s32 0, %v52
  %v54 = vrot.slane %v49, %v53
  %v60 = vunpack.c.l.b16 %v29
  %v61 = vunpack.c.l.b16 %v30
  %v62 = vunpack.c.l.b16 %v31
  %v63 = vunpack.c.l.b16 %v32
  %v64 = vpack.c.b16 %v61, %v60
  %v65 = vpack.c.b16 %v63, %v62
  %v84 = vunpack.c.l.b16 %v33
  %v85 = vunpack.c.l.b16 %v34
  %v86 = vunpack.c.l.b16 %v35
  %v87 = vunpack.c.l.b16 %v36
  %v88 = vunpack.c.l.b16 %v37
  %v89 = vunpack.c.l.b16 %v38
  %v90 = vunpack.c.l.b16 %v39
  %v91 = vunpack.c.l.b16 %v40
  %v92 = vunpack.c.l.b16 %v41
  %v93 = vunpack.c.l.b16 %v42
  %v94 = vunpack.c.l.b16 %v43
  %v95 = vunpack.c.l.b16 %v44
  %v96 = vunpack.c.l.b16 %v45
  %v97 = vunpack.c.l.b16 %v46
  %v98 = vunpack.c.l.b16 %v47
  %v99 = vunpack.c.l.b16 %v48
  %v100 = vpack.c.b16 %v85, %v84
  %v101 = vpack.c.b16 %v87, %v86
  %v102 = vpack.c.b16 %v89, %v88
  %v103 = vpack.c.b16 %v91, %v90
  %v104 = vpack.c.b16 %v93, %v92
  %v105 = vpack.c.b16 %v95, %v94
  %v106 = vpack.c.b16 %v97, %v96
  %v107 = vpack.c.b16 %v99, %v98
  %116 = vmatprep.subr.bf16.mxu0 0
  %117 = vmatpush1.bf16.msra.mxu0 %v100
  %118 = vmatprep.subr.bf16.mxu0 0
  %119 = vmatpush1.bf16.msra.mxu0 %v101
  %120 = vmatprep.subr.bf16.mxu0 0
  %121 = vmatpush1.bf16.msra.mxu0 %v102
  %122 = vmatprep.subr.bf16.mxu0 0
  %123 = vmatpush1.bf16.msra.mxu0 %v103
  %124 = vmatprep.subr.bf16.mxu0 0
  %125 = vmatpush1.bf16.msra.mxu0 %v104
  %126 = vmatprep.subr.bf16.mxu0 0
  %127 = vmatpush1.bf16.msra.mxu0 %v105
  %128 = vmatprep.subr.bf16.mxu0 0
  %129 = vmatpush1.bf16.msra.mxu0 %v106
  %130 = vmatprep.subr.bf16.mxu0 0
  %131 = vmatpush1.bf16.msra.mxu0 %v107
  %132 = vmatprep.subr.bf16.mxu0 0
  %133 = vmatpush1.bf16.msra.mxu0 0
  %134 = vmatprep.subr.bf16.mxu0 0
  %135 = vmatpush1.bf16.msra.mxu0 0
  %136 = vmatprep.subr.bf16.mxu0 0
  %137 = vmatpush1.bf16.msra.mxu0 0
  %138 = vmatprep.subr.bf16.mxu0 0
  %139 = vmatpush1.bf16.msra.mxu0 0
  %140 = vmatprep.subr.bf16.mxu0 0
  %141 = vmatpush1.bf16.msra.mxu0 0
  %142 = vmatprep.subr.bf16.mxu0 0
  %143 = vmatpush1.bf16.msra.mxu0 0
  %144 = vmatprep.subr.bf16.mxu0 0
  %145 = vmatpush1.bf16.msra.mxu0 0
  %146 = vmatprep.subr.bf16.mxu0 0
  %147 = vmatpush1.bf16.msra.mxu0 0
  %148 = vmatprep.mubr.bf16.mxu0 0
  %149 = vmatmul.mubr.bf16.gmra.mrb[0].mxu0 %v64
  %v150 = vpop.f32.mrb[0].mxu0
  %v151 = vadd.f32 %v54, %v150
  %v152 = vpop.f32.mrb[0].mxu0
  %v153 = vpop.f32.mrb[0].mxu0
  %v154 = vadd.f32 %v54, %v153
  %v155 = vpop.f32.mrb[0].mxu0
  %156 = vmatprep.mubr.bf16.mxu0 0
  %157 = vmatmul.mubr.bf16.gmra.mrb[0].mxu0 %v65
  %v158 = vpop.f32.mrb[0].mxu0
  %v159 = vadd.f32 %v54, %v158
  %v160 = vpop.f32.mrb[0].mxu0
  %v161 = vpop.f32.mrb[0].mxu0
  %v162 = vadd.f32 %v54, %v161
  %v163 = vpop.f32.mrb[0].mxu0
  %164 = vdwg.mxu0
  %v165 = vpack.c.bf16 %v154, %v151
  %v166 = vpack.c.bf16 %v162, %v159
  %v167 = vld [vmem:[%s1] sm:$0xf]
  %v168 = vld [vmem:[%s1 + $0x4] sm:$0xf]
  %v169 = vld [vmem:[%s1 + $0x8] sm:$0xf]
  %v170 = vld [vmem:[%s1 + $0xc] sm:$0xf]
  %v171 = vld [vmem:[%s4] sm:$0xf]
  %v172 = vld [vmem:[%s4 + $0x4] sm:$0xf]
  %v173 = vld [vmem:[%s4 + $0x8] sm:$0xf]
  %v174 = vld [vmem:[%s4 + $0xc] sm:$0xf]
  %v175 = vld [vmem:[%s4 + $0x10] sm:$0xf]
  %v176 = vld [vmem:[%s4 + $0x14] sm:$0xf]
  %v177 = vld [vmem:[%s4 + $0x18] sm:$0xf]
  %v178 = vld [vmem:[%s4 + $0x1c] sm:$0xf]
  %v179 = vld [vmem:[%s4 + $0x20] sm:$0xf]
  %v180 = vld [vmem:[%s4 + $0x24] sm:$0xf]
  %v181 = vld [vmem:[%s4 + $0x28] sm:$0xf]
  %v182 = vld [vmem:[%s4 + $0x2c] sm:$0xf]
  %v183 = vld [vmem:[%s4 + $0x30] sm:$0xf]
  %v184 = vld [vmem:[%s4 + $0x34] sm:$0xf]
  %v185 = vld [vmem:[%s4 + $0x38] sm:$0xf]
  %v186 = vld [vmem:[%s4 + $0x3c] sm:$0xf]
  %v187 = vld [vmem:[%s5] sm:$0xf]
  %v188 = vld [vmem:[%s5 + $0x4] sm:$0xf]
  %v189 = vld [vmem:[%s5 + $0x8] sm:$0xf]
  %v190 = vld [vmem:[%s5 + $0xc] sm:$0xf]
  %v191 = vld [vmem:[%s5 + $0x10] sm:$0xf]
  %v192 = vld [vmem:[%s5 + $0x14] sm:$0xf]
  %v193 = vld [vmem:[%s5 + $0x18] sm:$0xf]
  %v194 = vld [vmem:[%s5 + $0x1c] sm:$0xf]
  %v195 = vld [vmem:[%s5 + $0x20] sm:$0xf]
  %v196 = vld [vmem:[%s5 + $0x24] sm:$0xf]
  %v197 = vld [vmem:[%s5 + $0x28] sm:$0xf]
  %v198 = vld [vmem:[%s5 + $0x2c] sm:$0xf]
  %v199 = vld [vmem:[%s5 + $0x30] sm:$0xf]
  %v200 = vld [vmem:[%s5 + $0x34] sm:$0xf]
  %v201 = vld [vmem:[%s5 + $0x38] sm:$0xf]
  %v202 = vld [vmem:[%s5 + $0x3c] sm:$0xf]
  %v203 = vld [vmem:[%s6] sm:$0x1]
  %v206 = vunpack.c.l.b16 %v167
  %v207 = vunpack.c.l.b16 %v168
  %v208 = vpack.c.b16 %v207, %v206
  %vm209 = vcmask 130048
  %v211 = vsel %vm209, %v208, 0
  %213 = vmatprep.subr.bf16.mxu0 0
  %214 = vmatpush1.bf16.msra.mxu0 %v165
  %215 = vmatprep.subr.bf16.mxu0 0
  %216 = vmatpush1.bf16.msra.mxu0 0
  %217 = vmatprep.subr.bf16.mxu0 0
  %218 = vmatpush1.bf16.msra.mxu0 0
  %219 = vmatprep.subr.bf16.mxu0 0
  %220 = vmatpush1.bf16.msra.mxu0 0
  %221 = vmatprep.subr.bf16.mxu0 0
  %222 = vmatpush1.bf16.msra.mxu0 0
  %223 = vmatprep.subr.bf16.mxu0 0
  %224 = vmatpush1.bf16.msra.mxu0 0
  %225 = vmatprep.subr.bf16.mxu0 0
  %226 = vmatpush1.bf16.msra.mxu0 0
  %227 = vmatprep.subr.bf16.mxu0 0
  %228 = vmatpush1.bf16.msra.mxu0 0
  %229 = vmatprep.subr.bf16.mxu0 0
  %230 = vmatpush1.bf16.msra.mxu0 0
  %231 = vmatprep.subr.bf16.mxu0 0
  %232 = vmatpush1.bf16.msra.mxu0 0
  %233 = vmatprep.subr.bf16.mxu0 0
  %234 = vmatpush1.bf16.msra.mxu0 0
  %235 = vmatprep.subr.bf16.mxu0 0
  %236 = vmatpush1.bf16.msra.mxu0 0
  %237 = vmatprep.subr.bf16.mxu0 0
  %238 = vmatpush1.bf16.msra.mxu0 0
  %239 = vmatprep.subr.bf16.mxu0 0
  %240 = vmatpush1.bf16.msra.mxu0 0
  %241 = vmatprep.subr.bf16.mxu0 0
  %242 = vmatpush1.bf16.msra.mxu0 0
  %243 = vmatprep.subr.bf16.mxu0 0
  %244 = vmatpush1.bf16.msra.mxu0 0
  %245 = vmatprep.mubr.bf16.mxu0 0
  %246 = vmatmul.mubr.bf16.gmra.mrb[0].mxu0 %v211
  %v247 = vpop.f32.mrb[0].mxu0
  %v248 = vadd.f32 0.0, %v247
  %v249 = vpop.f32.mrb[0].mxu0
  %v250 = vpop.f32.mrb[0].mxu0
  %v251 = vadd.f32 0.0, %v250
  %v252 = vpop.f32.mrb[0].mxu0
  %253 = vdwg.mxu0
  %v256 = vunpack.c.l.b16 %v169
  %v257 = vunpack.c.l.b16 %v170
  %v258 = vpack.c.b16 %v257, %v256
  %v260 = vsel %vm209, %v258, 0
  %262 = vmatprep.subr.bf16.mxu0 0
  %263 = vmatpush1.bf16.msra.mxu0 %v166
  %264 = vmatprep.subr.bf16.mxu0 0
  %265 = vmatpush1.bf16.msra.mxu0 0
  %266 = vmatprep.subr.bf16.mxu0 0
  %267 = vmatpush1.bf16.msra.mxu0 0
  %268 = vmatprep.subr.bf16.mxu0 0
  %269 = vmatpush1.bf16.msra.mxu0 0
  %270 = vmatprep.subr.bf16.mxu0 0
  %271 = vmatpush1.bf16.msra.mxu0 0
  %272 = vmatprep.subr.bf16.mxu0 0
  %273 = vmatpush1.bf16.msra.mxu0 0
  %274 = vmatprep.subr.bf16.mxu0 0
  %275 = vmatpush1.bf16.msra.mxu0 0
  %276 = vmatprep.subr.bf16.mxu0 0
  %277 = vmatpush1.bf16.msra.mxu0 0
  %278 = vmatprep.subr.bf16.mxu0 0
  %279 = vmatpush1.bf16.msra.mxu0 0
  %280 = vmatprep.subr.bf16.mxu0 0
  %281 = vmatpush1.bf16.msra.mxu0 0
  %282 = vmatprep.subr.bf16.mxu0 0
  %283 = vmatpush1.bf16.msra.mxu0 0
  %284 = vmatprep.subr.bf16.mxu0 0
  %285 = vmatpush1.bf16.msra.mxu0 0
  %286 = vmatprep.subr.bf16.mxu0 0
  %287 = vmatpush1.bf16.msra.mxu0 0
  %288 = vmatprep.subr.bf16.mxu0 0
  %289 = vmatpush1.bf16.msra.mxu0 0
  %290 = vmatprep.subr.bf16.mxu0 0
  %291 = vmatpush1.bf16.msra.mxu0 0
  %292 = vmatprep.subr.bf16.mxu0 0
  %293 = vmatpush1.bf16.msra.mxu0 0
  %294 = vmatprep.mubr.bf16.mxu0 0
  %295 = vmatmul.mubr.bf16.gmra.mrb[0].mxu0 %v260
  %v296 = vpop.f32.mrb[0].mxu0
  %v297 = vadd.f32 0.0, %v296
  %v298 = vpop.f32.mrb[0].mxu0
  %v299 = vpop.f32.mrb[0].mxu0
  %v300 = vadd.f32 0.0, %v299
  %v301 = vpop.f32.mrb[0].mxu0
  %302 = vdwg.mxu0
  %v303 = vpack.c.bf16 %v251, %v248
  %v304 = vpack.c.bf16 %v300, %v297
  %v321 = vunpack.c.l.b16 %v187
  %v322 = vunpack.c.l.b16 %v188
  %v323 = vunpack.c.l.b16 %v189
  %v324 = vunpack.c.l.b16 %v190
  %v325 = vunpack.c.l.b16 %v191
  %v326 = vunpack.c.l.b16 %v192
  %v327 = vunpack.c.l.b16 %v193
  %v328 = vunpack.c.l.b16 %v194
  %v329 = vunpack.c.l.b16 %v195
  %v330 = vunpack.c.l.b16 %v196
  %v331 = vunpack.c.l.b16 %v197
  %v332 = vunpack.c.l.b16 %v198
  %v333 = vunpack.c.l.b16 %v199
  %v334 = vunpack.c.l.b16 %v200
  %v335 = vunpack.c.l.b16 %v201
  %v336 = vunpack.c.l.b16 %v202
  %v337 = vpack.c.b16 %v322, %v321
  %v338 = vpack.c.b16 %v324, %v323
  %v339 = vpack.c.b16 %v326, %v325
  %v340 = vpack.c.b16 %v328, %v327
  %v341 = vpack.c.b16 %v330, %v329
  %v342 = vpack.c.b16 %v332, %v331
  %v343 = vpack.c.b16 %v334, %v333
  %v344 = vpack.c.b16 %v336, %v335
  %353 = vmatprep.subr.bf16.mxu0 0
  %354 = vmatpush1.bf16.msra.mxu0 %v337
  %355 = vmatprep.subr.bf16.mxu0 0
  %356 = vmatpush1.bf16.msra.mxu0 %v338
  %357 = vmatprep.subr.bf16.mxu0 0
  %358 = vmatpush1.bf16.msra.mxu0 %v339
  %359 = vmatprep.subr.bf16.mxu0 0
  %360 = vmatpush1.bf16.msra.mxu0 %v340
  %361 = vmatprep.subr.bf16.mxu0 0
  %362 = vmatpush1.bf16.msra.mxu0 %v341
  %363 = vmatprep.subr.bf16.mxu0 0
  %364 = vmatpush1.bf16.msra.mxu0 %v342
  %365 = vmatprep.subr.bf16.mxu0 0
  %366 = vmatpush1.bf16.msra.mxu0 %v343
  %367 = vmatprep.subr.bf16.mxu0 0
  %368 = vmatpush1.bf16.msra.mxu0 %v344
  %369 = vmatprep.subr.bf16.mxu0 0
  %370 = vmatpush1.bf16.msra.mxu0 0
  %371 = vmatprep.subr.bf16.mxu0 0
  %372 = vmatpush1.bf16.msra.mxu0 0
  %373 = vmatprep.subr.bf16.mxu0 0
  %374 = vmatpush1.bf16.msra.mxu0 0
  %375 = vmatprep.subr.bf16.mxu0 0
  %376 = vmatpush1.bf16.msra.mxu0 0
  %377 = vmatprep.subr.bf16.mxu0 0
  %378 = vmatpush1.bf16.msra.mxu0 0
  %379 = vmatprep.subr.bf16.mxu0 0
  %380 = vmatpush1.bf16.msra.mxu0 0
  %381 = vmatprep.subr.bf16.mxu0 0
  %382 = vmatpush1.bf16.msra.mxu0 0
  %383 = vmatprep.subr.bf16.mxu0 0
  %384 = vmatpush1.bf16.msra.mxu0 0
  %385 = vmatprep.mubr.bf16.mxu0 0
  %386 = vmatmul.mubr.bf16.gmra.mrb[0].mxu0 %v165
  %v387 = vpop.f32.mrb[0].mxu0
  %v388 = vadd.f32 0.0, %v387
  %v389 = vpop.f32.mrb[0].mxu0
  %v390 = vpop.f32.mrb[0].mxu0
  %v391 = vadd.f32 0.0, %v390
  %v392 = vpop.f32.mrb[0].mxu0
  %393 = vmatprep.mubr.bf16.mxu0 0
  %394 = vmatmul.mubr.bf16.gmra.mrb[0].mxu0 %v166
  %v395 = vpop.f32.mrb[0].mxu0
  %v396 = vadd.f32 0.0, %v395
  %v397 = vpop.f32.mrb[0].mxu0
  %v398 = vpop.f32.mrb[0].mxu0
  %v399 = vadd.f32 0.0, %v398
  %v400 = vpop.f32.mrb[0].mxu0
  %401 = vdwg.mxu0
  %v418 = vunpack.c.l.b16 %v171
  %v419 = vunpack.c.l.b16 %v172
  %v420 = vunpack.c.l.b16 %v173
  %v421 = vunpack.c.l.b16 %v174
  %v422 = vunpack.c.l.b16 %v175
  %v423 = vunpack.c.l.b16 %v176
  %v424 = vunpack.c.l.b16 %v177
  %v425 = vunpack.c.l.b16 %v178
  %v426 = vunpack.c.l.b16 %v179
  %v427 = vunpack.c.l.b16 %v180
  %v428 = vunpack.c.l.b16 %v181
  %v429 = vunpack.c.l.b16 %v182
  %v430 = vunpack.c.l.b16 %v183
  %v431 = vunpack.c.l.b16 %v184
  %v432 = vunpack.c.l.b16 %v185
  %v433 = vunpack.c.l.b16 %v186
  %v434 = vpack.c.b16 %v419, %v418
  %v435 = vpack.c.b16 %v421, %v420
  %v436 = vpack.c.b16 %v423, %v422
  %v437 = vpack.c.b16 %v425, %v424
  %v438 = vpack.c.b16 %v427, %v426
  %v439 = vpack.c.b16 %v429, %v428
  %v440 = vpack.c.b16 %v431, %v430
  %v441 = vpack.c.b16 %v433, %v432
  %450 = vmatprep.subr.bf16.mxu0 0
  %451 = vmatpush1.bf16.msra.mxu0 %v434
  %452 = vmatprep.subr.bf16.mxu0 0
  %453 = vmatpush1.bf16.msra.mxu0 %v435
  %454 = vmatprep.subr.bf16.mxu0 0
  %455 = vmatpush1.bf16.msra.mxu0 %v436
  %456 = vmatprep.subr.bf16.mxu0 0
  %457 = vmatpush1.bf16.msra.mxu0 %v437
  %458 = vmatprep.subr.bf16.mxu0 0
  %459 = vmatpush1.bf16.msra.mxu0 %v438
  %460 = vmatprep.subr.bf16.mxu0 0
  %461 = vmatpush1.bf16.msra.mxu0 %v439
  %462 = vmatprep.subr.bf16.mxu0 0
  %463 = vmatpush1.bf16.msra.mxu0 %v440
  %464 = vmatprep.subr.bf16.mxu0 0
  %465 = vmatpush1.bf16.msra.mxu0 %v441
  %466 = vmatprep.subr.bf16.mxu0 0
  %467 = vmatpush1.bf16.msra.mxu0 0
  %468 = vmatprep.subr.bf16.mxu0 0
  %469 = vmatpush1.bf16.msra.mxu0 0
  %470 = vmatprep.subr.bf16.mxu0 0
  %471 = vmatpush1.bf16.msra.mxu0 0
  %472 = vmatprep.subr.bf16.mxu0 0
  %473 = vmatpush1.bf16.msra.mxu0 0
  %474 = vmatprep.subr.bf16.mxu0 0
  %475 = vmatpush1.bf16.msra.mxu0 0
  %476 = vmatprep.subr.bf16.mxu0 0
  %477 = vmatpush1.bf16.msra.mxu0 0
  %478 = vmatprep.subr.bf16.mxu0 0
  %479 = vmatpush1.bf16.msra.mxu0 0
  %480 = vmatprep.subr.bf16.mxu0 0
  %481 = vmatpush1.bf16.msra.mxu0 0
  %482 = vmatprep.mubr.bf16.mxu0 0
  %483 = vmatmul.mubr.bf16.gmra.mrb[0].mxu0 %v303
  %v484 = vpop.f32.mrb[0].mxu0
  %v485 = vadd.f32 %v388, %v484
  %v486 = vpop.f32.mrb[0].mxu0
  %v487 = vpop.f32.mrb[0].mxu0
  %v488 = vadd.f32 %v391, %v487
  %v489 = vpop.f32.mrb[0].mxu0
  %490 = vmatprep.mubr.bf16.mxu0 0
  %491 = vmatmul.mubr.bf16.gmra.mrb[0].mxu0 %v304
  %v492 = vpop.f32.mrb[0].mxu0
  %v493 = vadd.f32 %v396, %v492
  %v494 = vpop.f32.mrb[0].mxu0
  %v495 = vpop.f32.mrb[0].mxu0
  %v496 = vadd.f32 %v399, %v495
  %v497 = vpop.f32.mrb[0].mxu0
  %498 = vdwg.mxu0
  %v500 = vlaneseq
  %v501 = vshrl.u32 %v500, 7
  %v502 = vsub.s32 0, %v501
  %v503 = vrot.slane %v203, %v502
  %v505 = vadd.f32 %v485, %v503
  %v506 = vadd.f32 %v488, %v503
  %v507 = vadd.f32 %v493, %v503
  %v508 = vadd.f32 %v496, %v503
  %v509 = vadd.f32 %v505, %v506
  %v510 = vadd.f32 %v509, %v507
  %v511 = vadd.f32 %v510, %v508
  %v512 = vrot.slane %v511, 4
  %v513 = vadd.f32 %v511, %v512
  %v514 = vrot.slane %v513, 2
  %v515 = vadd.f32 %v513, %v514
  %v516 = vrot.slane %v515, 1
  %v517 = vadd.f32 %v515, %v516
  %v518 = vmul.f32 %v505, %v505
  %v519 = vmul.f32 %v506, %v506
  %v520 = vmul.f32 %v507, %v507
  %v521 = vmul.f32 %v508, %v508
  %v522 = vadd.f32 %v518, %v519
  %v523 = vadd.f32 %v522, %v520
  %v524 = vadd.f32 %v523, %v521
  %v525 = vrot.slane %v524, 4
  %v526 = vadd.f32 %v524, %v525
  %v527 = vrot.slane %v526, 2
  %v528 = vadd.f32 %v526, %v527
  %v529 = vrot.slane %v528, 1
  %v530 = vadd.f32 %v528, %v529
  %vm531 = vcmask 1040384
  %v532 = vsel %vm531, %v517, %v530
  %533 = vst [vmem:[%s7] sm:$0xff] %v505
  %534 = vst [vmem:[%s7 + $0x8] sm:$0xff] %v506
  %535 = vst [vmem:[%s7 + $0x10] sm:$0xff] %v507
  %536 = vst [vmem:[%s7 + $0x18] sm:$0xff] %v508
  %537 = vst [vmem:[%s8] sm:$0x3] %v532
  // Predicated region
  $region30: #{gnn_graph_extractor.3} parent=0 // pred_check
    _
  $region31: #{gnn_graph_extractor.3} parent=0 // pred_check_branch
    %539 = sbr.rel (0) target = $region33
  $region32: #{gnn_graph_extractor.3} parent=0 // pred_region
    _
  $region33: #{gnn_graph_extractor.3} parent=0 // pred_fallthru
    _
  // Predicated region
  $region34: #{gnn_graph_extractor.3} parent=0 // pred_check
    _
  $region35: #{gnn_graph_extractor.3} parent=0 // pred_check_branch
    %541 = sbr.rel (0) target = $region37
  $region36: #{gnn_graph_extractor.3} parent=0 // pred_region
    _
  $region37: #{gnn_graph_extractor.3} parent=0 // pred_fallthru
    _
  // Predicated region
  $region38: #{gnn_graph_extractor.3} parent=0 // pred_check
    _
  $region39: #{gnn_graph_extractor.3} parent=0 // pred_check_branch
    %543 = sbr.rel (0) target = $region41
  $region40: #{gnn_graph_extractor.3} parent=0 // pred_region
    _
  $region41: #{gnn_graph_extractor.3} parent=0 // pred_fallthru
    _
  // Predicated region
  $region42: #{gnn_graph_extractor.3} parent=0 // pred_check
    _
  $region43: #{gnn_graph_extractor.3} parent=0 // pred_check_branch
    %545 = sbr.rel (0) target = $region45
  $region44: #{gnn_graph_extractor.3} parent=0 // pred_region
    _
  $region45: #{gnn_graph_extractor.3} parent=0 // pred_fallthru
    _

// kernel: gnn_graph_extractor.4
$region0: #{gnn_graph_extractor.4}
  #allocation0 [shape = 'u32[]', space=smem, size = 0x4, offset = 0x4, fixed_abs, tag = 'smem constant byte address 0x4 - core index']
  #allocation1 [shape = 'u32[144,128]{1,0:T(1,128)}', space=vmem, size = 0x12000, scoped, tag = 'internal scratch']
  %s0 = inlined_call_operand.vmem [shape: f32[2,16,128], index: 0, kind: input, shape index: {}]
  %s1 = inlined_call_operand.vmem [shape: f32[1,2,128], index: 1, kind: input, shape index: {}]
  %s2 = inlined_call_operand.vmem [shape: bf16[2,16,16], index: 2, kind: input, shape index: {}]
  %s3 = inlined_call_operand.vmem [shape: f32[1,128], index: 3, kind: input, shape index: {}]
  %s4 = inlined_call_operand.vmem [shape: f32[1,128], index: 4, kind: input, shape index: {}]
  %s5 = inlined_call_operand.vmem [shape: bf16[128,128], index: 5, kind: input, shape index: {}]
  %s6 = inlined_call_operand.vmem [shape: bf16[128,128], index: 6, kind: input, shape index: {}]
  %s7 = inlined_call_operand.vmem [shape: f32[1,128], index: 7, kind: input, shape index: {}]
  %s8 = inlined_call_operand.vmem [shape: f32[2,16,128], index: 8, kind: output, shape index: {0}]
  %s9 = inlined_call_operand.vmem [shape: f32[1,2,128], index: 9, kind: output, shape index: {1}]
  %10 = xla_tuple %s8, %s9
  %s11 = sld [smem:[#allocation0]]
  $region50: #{gnn_graph_extractor.4} parent=0
    _
  %s13 = ssub.s32 1, %s11
  %s14 = scalar_select 0, %s13, %s11
  // Predicated region
  $region2: #{gnn_graph_extractor.4} parent=0 // pred_check
    _
  $region3: #{gnn_graph_extractor.4} parent=0 // pred_check_branch
    %16 = sbr.rel (0) target = $region5
  $region4: #{gnn_graph_extractor.4} parent=0 // pred_region
    _
  $region5: #{gnn_graph_extractor.4} parent=0 // pred_fallthru
    _
  // Predicated region
  $region6: #{gnn_graph_extractor.4} parent=0 // pred_check
    _
  $region7: #{gnn_graph_extractor.4} parent=0 // pred_check_branch
    %18 = sbr.rel (0) target = $region9
  $region8: #{gnn_graph_extractor.4} parent=0 // pred_region
    _
  $region9: #{gnn_graph_extractor.4} parent=0 // pred_fallthru
    _
  // Predicated region
  $region10: #{gnn_graph_extractor.4} parent=0 // pred_check
    _
  $region11: #{gnn_graph_extractor.4} parent=0 // pred_check_branch
    %20 = sbr.rel (0) target = $region13
  $region12: #{gnn_graph_extractor.4} parent=0 // pred_region
    _
  $region13: #{gnn_graph_extractor.4} parent=0 // pred_fallthru
    _
  // Predicated region
  $region14: #{gnn_graph_extractor.4} parent=0 // pred_check
    _
  $region15: #{gnn_graph_extractor.4} parent=0 // pred_check_branch
    %22 = sbr.rel (0) target = $region17
  $region16: #{gnn_graph_extractor.4} parent=0 // pred_region
    _
  $region17: #{gnn_graph_extractor.4} parent=0 // pred_fallthru
    _
  // Predicated region
  $region18: #{gnn_graph_extractor.4} parent=0 // pred_check
    _
  $region19: #{gnn_graph_extractor.4} parent=0 // pred_check_branch
    %24 = sbr.rel (0) target = $region21
  $region20: #{gnn_graph_extractor.4} parent=0 // pred_region
    _
  $region21: #{gnn_graph_extractor.4} parent=0 // pred_fallthru
    _
  // Predicated region
  $region22: #{gnn_graph_extractor.4} parent=0 // pred_check
    _
  $region23: #{gnn_graph_extractor.4} parent=0 // pred_check_branch
    %26 = sbr.rel (0) target = $region25
  $region24: #{gnn_graph_extractor.4} parent=0 // pred_region
    _
  $region25: #{gnn_graph_extractor.4} parent=0 // pred_fallthru
    _
  // Predicated region
  $region26: #{gnn_graph_extractor.4} parent=0 // pred_check
    _
  $region27: #{gnn_graph_extractor.4} parent=0 // pred_check_branch
    %28 = sbr.rel (0) target = $region29
  $region28: #{gnn_graph_extractor.4} parent=0 // pred_region
    _
  $region29: #{gnn_graph_extractor.4} parent=0 // pred_fallthru
    _
  // Predicated region
  $region30: #{gnn_graph_extractor.4} parent=0 // pred_check
    _
  $region31: #{gnn_graph_extractor.4} parent=0 // pred_check_branch
    %30 = sbr.rel (0) target = $region33
  $region32: #{gnn_graph_extractor.4} parent=0 // pred_region
    _
  $region33: #{gnn_graph_extractor.4} parent=0 // pred_fallthru
    _
  %v32 = vld [vmem:[%s1] sm:$0x3]
  %v33 = vadd.f32 %v32, 0.0
  %v34 = vld [vmem:[%s0] sm:$0xff]
  %v35 = vld [vmem:[%s0 + $0x8] sm:$0xff]
  %v36 = vld [vmem:[%s0 + $0x10] sm:$0xff]
  %v37 = vld [vmem:[%s0 + $0x18] sm:$0xff]
  %v38 = vld [vmem:[%s3] sm:$0x1]
  %v39 = vld [vmem:[%s4] sm:$0x1]
  %v40 = vmul.f32 %v33, 0.03125
  %v41 = vmul.f32 %v40, %v40
  %v43 = vrot.slane %v41, 7
  %v45 = vsub.f32 %v40, %v43
  %v46 = vmax.f32 %v45, 0.0
  %v47 = vadd.f32 %v46, 1e-05
  %v48 = vrsqrt.pop %v47
  %v51 = vunpack.c.l.s4 1966171168
  %v52 = vunpack.c.0.s8 %v51
  %v53 = vlaneseq
  %v54 = vshrl.u32 %v53, 7
  %v55 = vsub.s32 %v52, %v54
  %v56 = vrot.slane %v48, %v55
  %v57 = vcombine.high %v56, %v56
  %v59 = vunpack.c.l.s4 1966171168
  %v60 = vunpack.c.0.s8 %v59
  %v61 = vlaneseq
  %v62 = vshrl.u32 %v61, 7
  %v63 = vsub.s32 %v60, %v62
  %v64 = vrot.slane %v57, %v63
  %v66 = vmul.f32 %v38, %v64
  %v67 = vmul.f32 %v40, %v66
  %v68 = vsub.f32 %v39, %v67
  %v70 = vlaneseq
  %v71 = vshrl.u32 %v70, 7
  %v72 = vsub.s32 0, %v71
  %v73 = vrot.slane %v66, %v72
  %v75 = vmul.f32 %v34, %v73
  %v76 = vmul.f32 %v35, %v73
  %v77 = vmul.f32 %v36, %v73
  %v78 = vmul.f32 %v37, %v73
  %v80 = vlaneseq
  %v81 = vshrl.u32 %v80, 7
  %v82 = vsub.s32 0, %v81
  %v83 = vrot.slane %v68, %v82
  %v85 = vadd.f32 %v75, %v83
  %v86 = vadd.f32 %v76, %v83
  %v87 = vadd.f32 %v77, %v83
  %v88 = vadd.f32 %v78, %v83
  %v89 = vmul.f32 %v85, 0.01
  %v90 = vmul.f32 %v86, 0.01
  %v91 = vmul.f32 %v87, 0.01
  %v92 = vmul.f32 %v88, 0.01
  %v93 = vmax.f32 %v85, %v89
  %v94 = vmax.f32 %v86, %v90
  %v95 = vmax.f32 %v87, %v91
  %v96 = vmax.f32 %v88, %v92
  %v97 = vpack.c.bf16 %v94, %v93
  %v98 = vpack.c.bf16 %v96, %v95
  %v99 = vld [vmem:[%s2] sm:$0xf]
  %v100 = vld [vmem:[%s2 + $0x4] sm:$0xf]
  %v101 = vld [vmem:[%s2 + $0x8] sm:$0xf]
  %v102 = vld [vmem:[%s2 + $0xc] sm:$0xf]
  %v103 = vld [vmem:[%s5] sm:$0xf]
  %v104 = vld [vmem:[%s5 + $0x4] sm:$0xf]
  %v105 = vld [vmem:[%s5 + $0x8] sm:$0xf]
  %v106 = vld [vmem:[%s5 + $0xc] sm:$0xf]
  %v107 = vld [vmem:[%s5 + $0x10] sm:$0xf]
  %v108 = vld [vmem:[%s5 + $0x14] sm:$0xf]
  %v109 = vld [vmem:[%s5 + $0x18] sm:$0xf]
  %v110 = vld [vmem:[%s5 + $0x1c] sm:$0xf]
  %v111 = vld [vmem:[%s5 + $0x20] sm:$0xf]
  %v112 = vld [vmem:[%s5 + $0x24] sm:$0xf]
  %v113 = vld [vmem:[%s5 + $0x28] sm:$0xf]
  %v114 = vld [vmem:[%s5 + $0x2c] sm:$0xf]
  %v115 = vld [vmem:[%s5 + $0x30] sm:$0xf]
  %v116 = vld [vmem:[%s5 + $0x34] sm:$0xf]
  %v117 = vld [vmem:[%s5 + $0x38] sm:$0xf]
  %v118 = vld [vmem:[%s5 + $0x3c] sm:$0xf]
  %v119 = vld [vmem:[%s6] sm:$0xf]
  %v120 = vld [vmem:[%s6 + $0x4] sm:$0xf]
  %v121 = vld [vmem:[%s6 + $0x8] sm:$0xf]
  %v122 = vld [vmem:[%s6 + $0xc] sm:$0xf]
  %v123 = vld [vmem:[%s6 + $0x10] sm:$0xf]
  %v124 = vld [vmem:[%s6 + $0x14] sm:$0xf]
  %v125 = vld [vmem:[%s6 + $0x18] sm:$0xf]
  %v126 = vld [vmem:[%s6 + $0x1c] sm:$0xf]
  %v127 = vld [vmem:[%s6 + $0x20] sm:$0xf]
  %v128 = vld [vmem:[%s6 + $0x24] sm:$0xf]
  %v129 = vld [vmem:[%s6 + $0x28] sm:$0xf]
  %v130 = vld [vmem:[%s6 + $0x2c] sm:$0xf]
  %v131 = vld [vmem:[%s6 + $0x30] sm:$0xf]
  %v132 = vld [vmem:[%s6 + $0x34] sm:$0xf]
  %v133 = vld [vmem:[%s6 + $0x38] sm:$0xf]
  %v134 = vld [vmem:[%s6 + $0x3c] sm:$0xf]
  %v135 = vld [vmem:[%s7] sm:$0x1]
  %v138 = vunpack.c.l.b16 %v99
  %v139 = vunpack.c.l.b16 %v100
  %v140 = vpack.c.b16 %v139, %v138
  %vm141 = vcmask 130048
  %v143 = vsel %vm141, %v140, 0
  %145 = vmatprep.subr.bf16.mxu0 0
  %146 = vmatpush1.bf16.msra.mxu0 %v97
  %147 = vmatprep.subr.bf16.mxu0 0
  %148 = vmatpush1.bf16.msra.mxu0 0
  %149 = vmatprep.subr.bf16.mxu0 0
  %150 = vmatpush1.bf16.msra.mxu0 0
  %151 = vmatprep.subr.bf16.mxu0 0
  %152 = vmatpush1.bf16.msra.mxu0 0
  %153 = vmatprep.subr.bf16.mxu0 0
  %154 = vmatpush1.bf16.msra.mxu0 0
  %155 = vmatprep.subr.bf16.mxu0 0
  %156 = vmatpush1.bf16.msra.mxu0 0
  %157 = vmatprep.subr.bf16.mxu0 0
  %158 = vmatpush1.bf16.msra.mxu0 0
  %159 = vmatprep.subr.bf16.mxu0 0
  %160 = vmatpush1.bf16.msra.mxu0 0
  %161 = vmatprep.subr.bf16.mxu0 0
  %162 = vmatpush1.bf16.msra.mxu0 0
  %163 = vmatprep.subr.bf16.mxu0 0
  %164 = vmatpush1.bf16.msra.mxu0 0
  %165 = vmatprep.subr.bf16.mxu0 0
  %166 = vmatpush1.bf16.msra.mxu0 0
  %167 = vmatprep.subr.bf16.mxu0 0
  %168 = vmatpush1.bf16.msra.mxu0 0
  %169 = vmatprep.subr.bf16.mxu0 0
  %170 = vmatpush1.bf16.msra.mxu0 0
  %171 = vmatprep.subr.bf16.mxu0 0
  %172 = vmatpush1.bf16.msra.mxu0 0
  %173 = vmatprep.subr.bf16.mxu0 0
  %174 = vmatpush1.bf16.msra.mxu0 0
  %175 = vmatprep.subr.bf16.mxu0 0
  %176 = vmatpush1.bf16.msra.mxu0 0
  %177 = vmatprep.mubr.bf16.mxu0 0
  %178 = vmatmul.mubr.bf16.gmra.mrb[0].mxu0 %v143
  %v179 = vpop.f32.mrb[0].mxu0
  %v180 = vadd.f32 0.0, %v179
  %v181 = vpop.f32.mrb[0].mxu0
  %v182 = vpop.f32.mrb[0].mxu0
  %v183 = vadd.f32 0.0, %v182
  %v184 = vpop.f32.mrb[0].mxu0
  %185 = vdwg.mxu0
  %v188 = vunpack.c.l.b16 %v101
  %v189 = vunpack.c.l.b16 %v102
  %v190 = vpack.c.b16 %v189, %v188
  %v192 = vsel %vm141, %v190, 0
  %194 = vmatprep.subr.bf16.mxu0 0
  %195 = vmatpush1.bf16.msra.mxu0 %v98
  %196 = vmatprep.subr.bf16.mxu0 0
  %197 = vmatpush1.bf16.msra.mxu0 0
  %198 = vmatprep.subr.bf16.mxu0 0
  %199 = vmatpush1.bf16.msra.mxu0 0
  %200 = vmatprep.subr.bf16.mxu0 0
  %201 = vmatpush1.bf16.msra.mxu0 0
  %202 = vmatprep.subr.bf16.mxu0 0
  %203 = vmatpush1.bf16.msra.mxu0 0
  %204 = vmatprep.subr.bf16.mxu0 0
  %205 = vmatpush1.bf16.msra.mxu0 0
  %206 = vmatprep.subr.bf16.mxu0 0
  %207 = vmatpush1.bf16.msra.mxu0 0
  %208 = vmatprep.subr.bf16.mxu0 0
  %209 = vmatpush1.bf16.msra.mxu0 0
  %210 = vmatprep.subr.bf16.mxu0 0
  %211 = vmatpush1.bf16.msra.mxu0 0
  %212 = vmatprep.subr.bf16.mxu0 0
  %213 = vmatpush1.bf16.msra.mxu0 0
  %214 = vmatprep.subr.bf16.mxu0 0
  %215 = vmatpush1.bf16.msra.mxu0 0
  %216 = vmatprep.subr.bf16.mxu0 0
  %217 = vmatpush1.bf16.msra.mxu0 0
  %218 = vmatprep.subr.bf16.mxu0 0
  %219 = vmatpush1.bf16.msra.mxu0 0
  %220 = vmatprep.subr.bf16.mxu0 0
  %221 = vmatpush1.bf16.msra.mxu0 0
  %222 = vmatprep.subr.bf16.mxu0 0
  %223 = vmatpush1.bf16.msra.mxu0 0
  %224 = vmatprep.subr.bf16.mxu0 0
  %225 = vmatpush1.bf16.msra.mxu0 0
  %226 = vmatprep.mubr.bf16.mxu0 0
  %227 = vmatmul.mubr.bf16.gmra.mrb[0].mxu0 %v192
  %v228 = vpop.f32.mrb[0].mxu0
  %v229 = vadd.f32 0.0, %v228
  %v230 = vpop.f32.mrb[0].mxu0
  %v231 = vpop.f32.mrb[0].mxu0
  %v232 = vadd.f32 0.0, %v231
  %v233 = vpop.f32.mrb[0].mxu0
  %234 = vdwg.mxu0
  %v235 = vpack.c.bf16 %v183, %v180
  %v236 = vpack.c.bf16 %v232, %v229
  %v253 = vunpack.c.l.b16 %v119
  %v254 = vunpack.c.l.b16 %v120
  %v255 = vunpack.c.l.b16 %v121
  %v256 = vunpack.c.l.b16 %v122
  %v257 = vunpack.c.l.b16 %v123
  %v258 = vunpack.c.l.b16 %v124
  %v259 = vunpack.c.l.b16 %v125
  %v260 = vunpack.c.l.b16 %v126
  %v261 = vunpack.c.l.b16 %v127
  %v262 = vunpack.c.l.b16 %v128
  %v263 = vunpack.c.l.b16 %v129
  %v264 = vunpack.c.l.b16 %v130
  %v265 = vunpack.c.l.b16 %v131
  %v266 = vunpack.c.l.b16 %v132
  %v267 = vunpack.c.l.b16 %v133
  %v268 = vunpack.c.l.b16 %v134
  %v269 = vpack.c.b16 %v254, %v253
  %v270 = vpack.c.b16 %v256, %v255
  %v271 = vpack.c.b16 %v258, %v257
  %v272 = vpack.c.b16 %v260, %v259
  %v273 = vpack.c.b16 %v262, %v261
  %v274 = vpack.c.b16 %v264, %v263
  %v275 = vpack.c.b16 %v266, %v265
  %v276 = vpack.c.b16 %v268, %v267
  %285 = vmatprep.subr.bf16.mxu0 0
  %286 = vmatpush1.bf16.msra.mxu0 %v269
  %287 = vmatprep.subr.bf16.mxu0 0
  %288 = vmatpush1.bf16.msra.mxu0 %v270
  %289 = vmatprep.subr.bf16.mxu0 0
  %290 = vmatpush1.bf16.msra.mxu0 %v271
  %291 = vmatprep.subr.bf16.mxu0 0
  %292 = vmatpush1.bf16.msra.mxu0 %v272
  %293 = vmatprep.subr.bf16.mxu0 0
  %294 = vmatpush1.bf16.msra.mxu0 %v273
  %295 = vmatprep.subr.bf16.mxu0 0
  %296 = vmatpush1.bf16.msra.mxu0 %v274
  %297 = vmatprep.subr.bf16.mxu0 0
  %298 = vmatpush1.bf16.msra.mxu0 %v275
  %299 = vmatprep.subr.bf16.mxu0 0
  %300 = vmatpush1.bf16.msra.mxu0 %v276
  %301 = vmatprep.subr.bf16.mxu0 0
  %302 = vmatpush1.bf16.msra.mxu0 0
  %303 = vmatprep.subr.bf16.mxu0 0
  %304 = vmatpush1.bf16.msra.mxu0 0
  %305 = vmatprep.subr.bf16.mxu0 0
  %306 = vmatpush1.bf16.msra.mxu0 0
  %307 = vmatprep.subr.bf16.mxu0 0
  %308 = vmatpush1.bf16.msra.mxu0 0
  %309 = vmatprep.subr.bf16.mxu0 0
  %310 = vmatpush1.bf16.msra.mxu0 0
  %311 = vmatprep.subr.bf16.mxu0 0
  %312 = vmatpush1.bf16.msra.mxu0 0
  %313 = vmatprep.subr.bf16.mxu0 0
  %314 = vmatpush1.bf16.msra.mxu0 0
  %315 = vmatprep.subr.bf16.mxu0 0
  %316 = vmatpush1.bf16.msra.mxu0 0
  %317 = vmatprep.mubr.bf16.mxu0 0
  %318 = vmatmul.mubr.bf16.gmra.mrb[0].mxu0 %v97
  %v319 = vpop.f32.mrb[0].mxu0
  %v320 = vadd.f32 0.0, %v319
  %v321 = vpop.f32.mrb[0].mxu0
  %v322 = vpop.f32.mrb[0].mxu0
  %v323 = vadd.f32 0.0, %v322
  %v324 = vpop.f32.mrb[0].mxu0
  %325 = vmatprep.mubr.bf16.mxu0 0
  %326 = vmatmul.mubr.bf16.gmra.mrb[0].mxu0 %v98
  %v327 = vpop.f32.mrb[0].mxu0
  %v328 = vadd.f32 0.0, %v327
  %v329 = vpop.f32.mrb[0].mxu0
  %v330 = vpop.f32.mrb[0].mxu0
  %v331 = vadd.f32 0.0, %v330
  %v332 = vpop.f32.mrb[0].mxu0
  %333 = vdwg.mxu0
  %v350 = vunpack.c.l.b16 %v103
  %v351 = vunpack.c.l.b16 %v104
  %v352 = vunpack.c.l.b16 %v105
  %v353 = vunpack.c.l.b16 %v106
  %v354 = vunpack.c.l.b16 %v107
  %v355 = vunpack.c.l.b16 %v108
  %v356 = vunpack.c.l.b16 %v109
  %v357 = vunpack.c.l.b16 %v110
  %v358 = vunpack.c.l.b16 %v111
  %v359 = vunpack.c.l.b16 %v112
  %v360 = vunpack.c.l.b16 %v113
  %v361 = vunpack.c.l.b16 %v114
  %v362 = vunpack.c.l.b16 %v115
  %v363 = vunpack.c.l.b16 %v116
  %v364 = vunpack.c.l.b16 %v117
  %v365 = vunpack.c.l.b16 %v118
  %v366 = vpack.c.b16 %v351, %v350
  %v367 = vpack.c.b16 %v353, %v352
  %v368 = vpack.c.b16 %v355, %v354
  %v369 = vpack.c.b16 %v357, %v356
  %v370 = vpack.c.b16 %v359, %v358
  %v371 = vpack.c.b16 %v361, %v360
  %v372 = vpack.c.b16 %v363, %v362
  %v373 = vpack.c.b16 %v365, %v364
  %382 = vmatprep.subr.bf16.mxu0 0
  %383 = vmatpush1.bf16.msra.mxu0 %v366
  %384 = vmatprep.subr.bf16.mxu0 0
  %385 = vmatpush1.bf16.msra.mxu0 %v367
  %386 = vmatprep.subr.bf16.mxu0 0
  %387 = vmatpush1.bf16.msra.mxu0 %v368
  %388 = vmatprep.subr.bf16.mxu0 0
  %389 = vmatpush1.bf16.msra.mxu0 %v369
  %390 = vmatprep.subr.bf16.mxu0 0
  %391 = vmatpush1.bf16.msra.mxu0 %v370
  %392 = vmatprep.subr.bf16.mxu0 0
  %393 = vmatpush1.bf16.msra.mxu0 %v371
  %394 = vmatprep.subr.bf16.mxu0 0
  %395 = vmatpush1.bf16.msra.mxu0 %v372
  %396 = vmatprep.subr.bf16.mxu0 0
  %397 = vmatpush1.bf16.msra.mxu0 %v373
  %398 = vmatprep.subr.bf16.mxu0 0
  %399 = vmatpush1.bf16.msra.mxu0 0
  %400 = vmatprep.subr.bf16.mxu0 0
  %401 = vmatpush1.bf16.msra.mxu0 0
  %402 = vmatprep.subr.bf16.mxu0 0
  %403 = vmatpush1.bf16.msra.mxu0 0
  %404 = vmatprep.subr.bf16.mxu0 0
  %405 = vmatpush1.bf16.msra.mxu0 0
  %406 = vmatprep.subr.bf16.mxu0 0
  %407 = vmatpush1.bf16.msra.mxu0 0
  %408 = vmatprep.subr.bf16.mxu0 0
  %409 = vmatpush1.bf16.msra.mxu0 0
  %410 = vmatprep.subr.bf16.mxu0 0
  %411 = vmatpush1.bf16.msra.mxu0 0
  %412 = vmatprep.subr.bf16.mxu0 0
  %413 = vmatpush1.bf16.msra.mxu0 0
  %414 = vmatprep.mubr.bf16.mxu0 0
  %415 = vmatmul.mubr.bf16.gmra.mrb[0].mxu0 %v235
  %v416 = vpop.f32.mrb[0].mxu0
  %v417 = vadd.f32 %v320, %v416
  %v418 = vpop.f32.mrb[0].mxu0
  %v419 = vpop.f32.mrb[0].mxu0
  %v420 = vadd.f32 %v323, %v419
  %v421 = vpop.f32.mrb[0].mxu0
  %422 = vmatprep.mubr.bf16.mxu0 0
  %423 = vmatmul.mubr.bf16.gmra.mrb[0].mxu0 %v236
  %v424 = vpop.f32.mrb[0].mxu0
  %v425 = vadd.f32 %v328, %v424
  %v426 = vpop.f32.mrb[0].mxu0
  %v427 = vpop.f32.mrb[0].mxu0
  %v428 = vadd.f32 %v331, %v427
  %v429 = vpop.f32.mrb[0].mxu0
  %430 = vdwg.mxu0
  %v432 = vlaneseq
  %v433 = vshrl.u32 %v432, 7
  %v434 = vsub.s32 0, %v433
  %v435 = vrot.slane %v135, %v434
  %v437 = vadd.f32 %v417, %v435
  %v438 = vadd.f32 %v420, %v435
  %v439 = vadd.f32 %v425, %v435
  %v440 = vadd.f32 %v428, %v435
  %v441 = vadd.f32 %v437, %v438
  %v442 = vadd.f32 %v441, %v439
  %v443 = vadd.f32 %v442, %v440
  %v444 = vrot.slane %v443, 4
  %v445 = vadd.f32 %v443, %v444
  %v446 = vrot.slane %v445, 2
  %v447 = vadd.f32 %v445, %v446
  %v448 = vrot.slane %v447, 1
  %v449 = vadd.f32 %v447, %v448
  %v450 = vmul.f32 %v437, %v437
  %v451 = vmul.f32 %v438, %v438
  %v452 = vmul.f32 %v439, %v439
  %v453 = vmul.f32 %v440, %v440
  %v454 = vadd.f32 %v450, %v451
  %v455 = vadd.f32 %v454, %v452
  %v456 = vadd.f32 %v455, %v453
  %v457 = vrot.slane %v456, 4
  %v458 = vadd.f32 %v456, %v457
  %v459 = vrot.slane %v458, 2
  %v460 = vadd.f32 %v458, %v459
  %v461 = vrot.slane %v460, 1
  %v462 = vadd.f32 %v460, %v461
  %vm463 = vcmask 1040384
  %v464 = vsel %vm463, %v449, %v462
  %465 = vst [vmem:[%s8] sm:$0xff] %v437
  %466 = vst [vmem:[%s8 + $0x8] sm:$0xff] %v438
  %467 = vst [vmem:[%s8 + $0x10] sm:$0xff] %v439
  %468 = vst [vmem:[%s8 + $0x18] sm:$0xff] %v440
  %469 = vst [vmem:[%s9] sm:$0x3] %v464
  // Predicated region
  $region34: #{gnn_graph_extractor.4} parent=0 // pred_check
    _
  $region35: #{gnn_graph_extractor.4} parent=0 // pred_check_branch
    %471 = sbr.rel (0) target = $region37
  $region36: #{gnn_graph_extractor.4} parent=0 // pred_region
    _
  $region37: #{gnn_graph_extractor.4} parent=0 // pred_fallthru
    _
  // Predicated region
  $region38: #{gnn_graph_extractor.4} parent=0 // pred_check
    _
  $region39: #{gnn_graph_extractor.4} parent=0 // pred_check_branch
    %473 = sbr.rel (0) target = $region41
  $region40: #{gnn_graph_extractor.4} parent=0 // pred_region
    _
  $region41: #{gnn_graph_extractor.4} parent=0 // pred_fallthru
    _
  // Predicated region
  $region42: #{gnn_graph_extractor.4} parent=0 // pred_check
    _
  $region43: #{gnn_graph_extractor.4} parent=0 // pred_check_branch
    %475 = sbr.rel (0) target = $region45
  $region44: #{gnn_graph_extractor.4} parent=0 // pred_region
    _
  $region45: #{gnn_graph_extractor.4} parent=0 // pred_fallthru
    _
  // Predicated region
  $region46: #{gnn_graph_extractor.4} parent=0 // pred_check
    _
  $region47: #{gnn_graph_extractor.4} parent=0 // pred_check_branch
    %477 = sbr.rel (0) target = $region49
  $region48: #{gnn_graph_extractor.4} parent=0 // pred_region
    _
  $region49: #{gnn_graph_extractor.4} parent=0 // pred_fallthru
    _

</llo_original>
